<compile_context>
chip_gen: v6e
topology: v6e:2x2x1
jax: 0.10.0
libtpu: 0.0.40
codegen_flags: <defaults>
</compile_context>

<pallas_src>
import jax
import jax.numpy as jnp
from jax.experimental import pallas as pl
from jax.experimental.pallas import tpu as pltpu

BN_EPS = 1e-5


def _round_up(x, m):
    return (x + m - 1) // m * m


# ----------------------------------------------------------------------------
# Host-side weight packing
# ----------------------------------------------------------------------------
def _toeplitz_rows(w, W):
    """w: (3,3,Cin,Cout) -> [3 x ((W+2)*Cin, W*Cout)] block-Toeplitz matrices.

    M_kh[(wpos+kw)*Cin + ci, wpos*Cout + co] = w[kh, kw, ci, co], so a 'same'
    3x3 conv on the (zero-padded, width-channel-packed) input becomes
        y[h, :] = sum_kh  x_pad[h+kh, :] @ M_kh      (one MXU matmul per kh).
    """
    cin, cout = w.shape[2], w.shape[3]
    eye = jnp.eye(W, dtype=jnp.float32)
    mats = []
    for kh in range(3):
        m = jnp.zeros(((W + 2) * cin, W * cout), jnp.float32)
        for kw in range(3):
            shift = jnp.zeros((W + 2, W), jnp.float32).at[kw:kw + W, :].set(eye)
            m = m + jnp.kron(shift, w[kh, kw].astype(jnp.float32))
        mats.append(m)
    return mats


# ----------------------------------------------------------------------------
# Fused forward kernel (one program per batch element)
# ----------------------------------------------------------------------------
def _make_kernel(H, W, C1, NC, K1, K2, WC1, WC2, WNC,
                 K1P, K2P, R_W1, R_W2, R_WH, R_VEC):
    H1, H2 = H // 4, H // 16

    def kernel(x_ref, p_ref, out_ref, pad_ref):
        # x_ref:   (H+2, (W+2)*Cin)  width-channel packed, zero 'same' halo
        # p_ref:   (P_ROWS, 128)     all parameters, packed
        # out_ref: (1, NC)
        # pad_ref: (H1+2, (W+2)*C1)  VMEM scratch for conv2's zero halo

        def wt1(kh):
            r0 = R_W1 + K1P * kh
            return p_ref[r0:r0 + K1, 0:WC1]

        def wt2(kh):
            r0 = R_W2 + K2P * kh
            return p_ref[r0:r0 + K2, 0:WC2]

        def vec(i, width):
            return p_ref[R_VEC + i:R_VEC + i + 1, 0:width]

        # ---- stage 1: lifting conv (3x3 'same') as 3 Toeplitz matmuls -------
        h = jnp.dot(x_ref[0:H, :], wt1(0), preferred_element_type=jnp.float32)
        for kh in (1, 2):
            h = h + jnp.dot(x_ref[kh:kh + H, :], wt1(kh),
                            preferred_element_type=jnp.float32)
        h = h + vec(0, WC1)                          # conv bias (tiled over W)

        # MaxPool(4,1) over H  +  BatchNorm affine  +  ReLU   (lane-dense 2-D)
        h = jnp.max(h.reshape(H1, 4, WC1), axis=1)   # (H1, W*C1)
        h = jnp.maximum(h * vec(1, WC1) + vec(2, WC1), 0.0)

        # ---- zero-halo scratch for conv2's 'same' padding --------------------
        pad_ref[...] = jnp.zeros_like(pad_ref)
        pad_ref[1:H1 + 1, C1:C1 + WC1] = h           # interior only; halo = 0

        # ---- stage 2: conv + pool + BN + ReLU --------------------------------
        g = jnp.dot(pad_ref[0:H1, :], wt2(0), preferred_element_type=jnp.float32)
        for kh in (1, 2):
            g = g + jnp.dot(pad_ref[kh:kh + H1, :], wt2(kh),
                            preferred_element_type=jnp.float32)
        g = g + vec(3, WC2)
        g = jnp.max(g.reshape(H2, 4, WC2), axis=1)   # (H2, W*C2)
        g = jnp.maximum(g * vec(4, WC2) + vec(5, WC2), 0.0)

        # ---- head: mean over H, 1x1 conv as block-diag matmul, max over W ----
        xm = jnp.mean(g, axis=0, keepdims=True)      # (1, W*C2)
        wh = p_ref[R_WH:R_WH + WC2, 0:WNC]           # block-diag (W*C2, W*NC)
        logits = jnp.dot(xm, wh, preferred_element_type=jnp.float32)  # (1, W*NC)
        res = logits[:, 0:NC]
        for w in range(1, W):
            res = jnp.maximum(res, logits[:, w * NC:(w + 1) * NC])
        out_ref[...] = res + vec(6, NC)              # class bias after the max

    return kernel


# ----------------------------------------------------------------------------
# Wrapper: mirrors AudioClassifier.forward (inference-mode BatchNorm)
# ----------------------------------------------------------------------------
def audio_classifier_forward(x_nchw, params, eps=BN_EPS):
    B, Cin, H, W = x_nchw.shape
    assert H % 16 == 0, "two (4,1) max-pools require H % 16 == 0"

    C1 = params["w_lift"].shape[-1]
    C2 = params["w_conv1"].shape[-1]
    NC = params["w_out"].shape[-1]
    H1 = H // 4

    K1, K2 = (W + 2) * Cin, (W + 2) * C1
    WC1, WC2, WNC = W * C1, W * C2, W * NC
    K1P, K2P = _round_up(K1, 8), _round_up(K2, 8)
    WHP = _round_up(WC2, 8)
    PCOLS = _round_up(max(WC1, WC2, WNC, NC), 128)

    R_W1 = 0
    R_W2 = R_W1 + 3 * K1P
    R_WH = R_W2 + 3 * K2P
    R_VEC = R_WH + WHP
    P_ROWS = R_VEC + 8

    # ---- pack every parameter into ONE flat f32 buffer (=> 2 input DMAs) ----
    def blk(m, rows):
        m = m.astype(jnp.float32)
        return jnp.pad(m, ((0, rows - m.shape[0]), (0, PCOLS - m.shape[1])))

    def bn_affine(bn):
        gamma, beta, mean, var = bn
        s = gamma / jnp.sqrt(var + eps)
        return s, beta - mean * s

    s0, t0 = bn_affine(params["bn0"])
    s1, t1 = bn_affine(params["bn1"])

    pieces = [blk(m, K1P) for m in _toeplitz_rows(params["w_lift"], W)]
    pieces += [blk(m, K2P) for m in _toeplitz_rows(params["w_conv1"], W)]
    pieces.append(blk(jnp.kron(jnp.eye(W, dtype=jnp.float32),
                               params["w_out"].astype(jnp.float32)), WHP))
    vecs = jnp.zeros((8, PCOLS), jnp.float32)
    vecs = vecs.at[0, :WC1].set(jnp.tile(params["b_lift"].astype(jnp.float32), W))
    vecs = vecs.at[1, :WC1].set(jnp.tile(s0, W))
    vecs = vecs.at[2, :WC1].set(jnp.tile(t0, W))
    vecs = vecs.at[3, :WC2].set(jnp.tile(params["b_conv1"].astype(jnp.float32), W))
    vecs = vecs.at[4, :WC2].set(jnp.tile(s1, W))
    vecs = vecs.at[5, :WC2].set(jnp.tile(t1, W))
    vecs = vecs.at[6, :NC].set(params["b_out"].astype(jnp.float32))
    pieces.append(vecs)
    pbuf = jnp.concatenate(pieces, axis=0)             # (P_ROWS, PCOLS)

    # ---- input: NCHW -> width-channel packed (B, H+2, (W+2)*Cin) + zero halo
    x = jnp.transpose(x_nchw, (0, 2, 3, 1)).astype(jnp.float32)
    x = jnp.pad(x, ((0, 0), (1, 1), (1, 1), (0, 0)))
    x = x.reshape(B, H + 2, (W + 2) * Cin)

    kernel = _make_kernel(H, W, C1, NC, K1, K2, WC1, WC2, WNC,
                          K1P, K2P, R_W1, R_W2, R_WH, R_VEC)

    out = pl.pallas_call(
        kernel,
        out_shape=jax.ShapeDtypeStruct((B, 1, NC), jnp.float32),
        grid=(B,),
        in_specs=[
            pl.BlockSpec((None, H + 2, K1), lambda b: (b, 0, 0)),
            pl.BlockSpec((P_ROWS, PCOLS), lambda b: (0, 0)),
        ],
        out_specs=pl.BlockSpec((None, 1, NC), lambda b: (b, 0, 0)),
        scratch_shapes=[pltpu.VMEM((H1 + 2, K2), jnp.float32)],
        compiler_params=pltpu.CompilerParams(
            dimension_semantics=("parallel",),         # both TCs on v7x
            vmem_limit_bytes=8 * 1024 * 1024),         # lean: actual use < 1 MiB
    )(x, pbuf)
    return out[:, 0, :]


# ----------------------------------------------------------------------------
# Plain-JAX reference (same math) for validation
# ----------------------------------------------------------------------------
def _reference_forward(x_nchw, params, eps):
    hp = jax.lax.Precision.HIGHEST
    x = jnp.transpose(x_nchw, (0, 2, 3, 1))

    def conv3x3(x, w, b):
        y = jax.lax.conv_general_dilated(
            x, w, window_strides=(1, 1), padding="SAME",
            dimension_numbers=("NHWC", "HWIO", "NHWC"), precision=hp)
        return y + b

    def pool_bn_relu(x, bn):
        g, bta, m, v = bn
        Bq, Hq, Wq, Cq = x.shape
        p = jnp.max(x.reshape(Bq, Hq // 4, 4, Wq, Cq), axis=2)
        s = g / jnp.sqrt(v + eps)
        return jax.nn.relu(p * s + (bta - m * s))

    x = pool_bn_relu(conv3x3(x, params["w_lift"], params["b_lift"]), params["bn0"])
    x = pool_bn_relu(conv3x3(x, params["w_conv1"], params["b_conv1"]), params["bn1"])
    xm = jnp.mean(x, axis=1)                                   # (B, W, C2)
    y = jnp.einsum("bwc,cn->bwn", xm, params["w_out"], precision=hp)
    y = y + params["b_out"]
    return jnp.max(y, axis=1)                                  # (B, n_classes)


if __name__ == "__main__":
    B, Cin, H, W = 2, 1, 64, 8          # audio-like NCHW input (time = H)
    C1, C2, NCLS = 8, 16, 10

    key = jax.random.PRNGKey(0)
    ks = jax.random.split(key, 9)

    x = jax.random.normal(ks[0], (B, Cin, H, W), jnp.float32)

    def bn_params(k, c):
        k1, k2, k3, k4 = jax.random.split(k, 4)
        gamma = 1.0 + 0.1 * jax.random.normal(k1, (c,), jnp.float32)
        beta = 0.1 * jax.random.normal(k2, (c,), jnp.float32)
        rmean = 0.1 * jax.random.normal(k3, (c,), jnp.float32)
        rvar = jax.random.uniform(k4, (c,), jnp.float32, minval=0.5, maxval=1.5)
        return (gamma, beta, rmean, rvar)

    params = {
        "w_lift": 0.1 * jax.random.normal(ks[1], (3, 3, Cin, C1), jnp.float32),
        "b_lift": 0.1 * jax.random.normal(ks[2], (C1,), jnp.float32),
        "bn0": bn_params(ks[3], C1),
        "w_conv1": 0.1 * jax.random.normal(ks[4], (3, 3, C1, C2), jnp.float32),
        "b_conv1": 0.1 * jax.random.normal(ks[5], (C2,), jnp.float32),
        "bn1": bn_params(ks[6], C2),
        "w_out": 0.1 * jax.random.normal(ks[7], (C2, NCLS), jnp.float32),
        "b_out": 0.1 * jax.random.normal(ks[8], (NCLS,), jnp.float32),
    }

    fwd = jax.jit(audio_classifier_forward)
    out = jax.block_until_ready(fwd(x, params))
    assert out.shape == (B, NCLS), out.shape
    assert out.dtype == jnp.float32

    ref = jax.block_until_ready(_reference_forward(x, params, BN_EPS))
    # Tolerance covers the case where the in-kernel f32 MXU matmuls run with
    # reduced-precision passes at default precision; layout/indexing bugs would
    # produce errors orders of magnitude larger.
    err = float(jnp.max(jnp.abs(out - ref)))
    assert jnp.allclose(out, ref, atol=2e-2, rtol=2e-2), "max abs err = %g" % err

    # TODO(synk): BatchNorm2d runs in inference mode (running statistics);
    # training-mode batch statistics would need an extra per-channel reduction.
    print("KERNEL_OK")
</pallas_src>

<mosaic_0001>
module attributes {stable_mosaic.version = 11 : i64} {
  func.func @kernel(%arg0: i32, %arg1: memref<1x66x10xf32, #tpu.memory_space<vmem>>, %arg2: memref<424x128xf32, #tpu.memory_space<vmem>>, %arg3: memref<1x1x10xf32, #tpu.memory_space<vmem>>, %arg4: memref<18x80xf32, #tpu.memory_space<vmem>>) attributes {dimension_semantics = [#tpu.dimension_semantics<parallel>], iteration_bounds = array<i64: 2>, scalar_prefetch = 0 : i64, scratch_operands = 1 : i64, tpu.core_type = #tpu.core_type<tc>, window_params = [{transform_indices = @transform_0, window_bounds = array<i64: 1, 66, 10>}, {pipeline_mode = #tpu.pipeline_mode<synchronous>, transform_indices = @transform_1, window_bounds = array<i64: 424, 128>}, {transform_indices = @transform_2, window_bounds = array<i64: 1, 1, 10>}]} {
    %c0 = arith.constant 0 : index
    %c0_0 = arith.constant 0 : index
    %c0_1 = arith.constant 0 : index
    %0 = vector.load %arg1[%c0, %c0_0, %c0_1] : memref<1x66x10xf32, #tpu.memory_space<vmem>>, vector<1x64x10xf32>
    %1 = vector.shape_cast %0 : vector<1x64x10xf32> to vector<64x10xf32>
    %c0_2 = arith.constant 0 : index
    %c0_3 = arith.constant 0 : index
    %2 = vector.load %arg2[%c0_2, %c0_3] : memref<424x128xf32, #tpu.memory_space<vmem>>, vector<10x64xf32>
    %cst = arith.constant dense<0.000000e+00> : vector<64x64xf32>
    %3 = tpu.matmul %1, %2, %cst {dimension_numbers = #tpu.dot_dimension_numbers<[1], [0], [0], [1], [0, 0, 1, 1], [], []>} : vector<64x10xf32>, vector<10x64xf32>, vector<64x64xf32> -> vector<64x64xf32>
    %c0_4 = arith.constant 0 : index
    %c1 = arith.constant 1 : index
    %c0_5 = arith.constant 0 : index
    %4 = vector.load %arg1[%c0_4, %c1, %c0_5] : memref<1x66x10xf32, #tpu.memory_space<vmem>>, vector<1x64x10xf32>
    %5 = vector.shape_cast %4 : vector<1x64x10xf32> to vector<64x10xf32>
    %c16 = arith.constant 16 : index
    %c0_6 = arith.constant 0 : index
    %6 = vector.load %arg2[%c16, %c0_6] : memref<424x128xf32, #tpu.memory_space<vmem>>, vector<10x64xf32>
    %cst_7 = arith.constant dense<0.000000e+00> : vector<64x64xf32>
    %7 = tpu.matmul %5, %6, %cst_7 {dimension_numbers = #tpu.dot_dimension_numbers<[1], [0], [0], [1], [0, 0, 1, 1], [], []>} : vector<64x10xf32>, vector<10x64xf32>, vector<64x64xf32> -> vector<64x64xf32>
    %8 = arith.addf %3, %7 : vector<64x64xf32>
    %c0_8 = arith.constant 0 : index
    %c2 = arith.constant 2 : index
    %c0_9 = arith.constant 0 : index
    %9 = vector.load %arg1[%c0_8, %c2, %c0_9] : memref<1x66x10xf32, #tpu.memory_space<vmem>>, vector<1x64x10xf32>
    %10 = vector.shape_cast %9 : vector<1x64x10xf32> to vector<64x10xf32>
    %c32 = arith.constant 32 : index
    %c0_10 = arith.constant 0 : index
    %11 = vector.load %arg2[%c32, %c0_10] : memref<424x128xf32, #tpu.memory_space<vmem>>, vector<10x64xf32>
    %cst_11 = arith.constant dense<0.000000e+00> : vector<64x64xf32>
    %12 = tpu.matmul %10, %11, %cst_11 {dimension_numbers = #tpu.dot_dimension_numbers<[1], [0], [0], [1], [0, 0, 1, 1], [], []>} : vector<64x10xf32>, vector<10x64xf32>, vector<64x64xf32> -> vector<64x64xf32>
    %13 = arith.addf %8, %12 : vector<64x64xf32>
    %c416 = arith.constant 416 : index
    %c0_12 = arith.constant 0 : index
    %14 = vector.load %arg2[%c416, %c0_12] : memref<424x128xf32, #tpu.memory_space<vmem>>, vector<1x64xf32>
    %15 = vector.broadcast %14 : vector<1x64xf32> to vector<64x64xf32>
    %16 = arith.addf %13, %15 : vector<64x64xf32>
    %17 = vector.shape_cast %16 : vector<64x64xf32> to vector<16x4x64xf32>
    %cst_13 = arith.constant dense<0xFF800000> : vector<16x64xf32>
    %18 = vector.multi_reduction <maximumf>, %17, %cst_13 [1] : vector<16x4x64xf32> to vector<16x64xf32>
    %c417 = arith.constant 417 : index
    %c0_14 = arith.constant 0 : index
    %19 = vector.load %arg2[%c417, %c0_14] : memref<424x128xf32, #tpu.memory_space<vmem>>, vector<1x64xf32>
    %20 = vector.broadcast %19 : vector<1x64xf32> to vector<16x64xf32>
    %21 = arith.mulf %18, %20 : vector<16x64xf32>
    %c418 = arith.constant 418 : index
    %c0_15 = arith.constant 0 : index
    %22 = vector.load %arg2[%c418, %c0_15] : memref<424x128xf32, #tpu.memory_space<vmem>>, vector<1x64xf32>
    %23 = vector.broadcast %22 : vector<1x64xf32> to vector<16x64xf32>
    %24 = arith.addf %21, %23 : vector<16x64xf32>
    %cst_16 = arith.constant 0.000000e+00 : f32
    %25 = vector.broadcast %cst_16 : f32 to vector<16x64xf32>
    %26 = arith.maximumf %24, %25 : vector<16x64xf32>
    %cst_17 = arith.constant 0.000000e+00 : f32
    %27 = vector.broadcast %cst_17 : f32 to vector<18x80xf32>
    %c0_18 = arith.constant 0 : index
    %c0_19 = arith.constant 0 : index
    %28 = vector.load %arg4[%c0_18, %c0_19] : memref<18x80xf32, #tpu.memory_space<vmem>>, vector<18x80xf32>
    tpu.vector_store %arg4[%c0_18, %c0_19], %27 {strides = array<i32>} : memref<18x80xf32, #tpu.memory_space<vmem>>, vector<18x80xf32>,
    %c1_20 = arith.constant 1 : index
    %c8 = arith.constant 8 : index
    %29 = vector.load %arg4[%c1_20, %c8] : memref<18x80xf32, #tpu.memory_space<vmem>>, vector<16x64xf32>
    tpu.vector_store %arg4[%c1_20, %c8], %26 {strides = array<i32>} : memref<18x80xf32, #tpu.memory_space<vmem>>, vector<16x64xf32>,
    %c0_21 = arith.constant 0 : index
    %c0_22 = arith.constant 0 : index
    %30 = vector.load %arg4[%c0_21, %c0_22] : memref<18x80xf32, #tpu.memory_space<vmem>>, vector<16x80xf32>
    %c48 = arith.constant 48 : index
    %c0_23 = arith.constant 0 : index
    %31 = vector.load %arg2[%c48, %c0_23] : memref<424x128xf32, #tpu.memory_space<vmem>>, vector<80x128xf32>
    %cst_24 = arith.constant dense<0.000000e+00> : vector<16x128xf32>
    %32 = tpu.matmul %30, %31, %cst_24 {dimension_numbers = #tpu.dot_dimension_numbers<[1], [0], [0], [1], [0, 0, 1, 1], [], []>} : vector<16x80xf32>, vector<80x128xf32>, vector<16x128xf32> -> vector<16x128xf32>
    %c1_25 = arith.constant 1 : index
    %c0_26 = arith.constant 0 : index
    %33 = vector.load %arg4[%c1_25, %c0_26] : memref<18x80xf32, #tpu.memory_space<vmem>>, vector<16x80xf32>
    %c128 = arith.constant 128 : index
    %c0_27 = arith.constant 0 : index
    %34 = vector.load %arg2[%c128, %c0_27] : memref<424x128xf32, #tpu.memory_space<vmem>>, vector<80x128xf32>
    %cst_28 = arith.constant dense<0.000000e+00> : vector<16x128xf32>
    %35 = tpu.matmul %33, %34, %cst_28 {dimension_numbers = #tpu.dot_dimension_numbers<[1], [0], [0], [1], [0, 0, 1, 1], [], []>} : vector<16x80xf32>, vector<80x128xf32>, vector<16x128xf32> -> vector<16x128xf32>
    %36 = arith.addf %32, %35 : vector<16x128xf32>
    %c2_29 = arith.constant 2 : index
    %c0_30 = arith.constant 0 : index
    %37 = vector.load %arg4[%c2_29, %c0_30] : memref<18x80xf32, #tpu.memory_space<vmem>>, vector<16x80xf32>
    %c208 = arith.constant 208 : index
    %c0_31 = arith.constant 0 : index
    %38 = vector.load %arg2[%c208, %c0_31] : memref<424x128xf32, #tpu.memory_space<vmem>>, vector<80x128xf32>
    %cst_32 = arith.constant dense<0.000000e+00> : vector<16x128xf32>
    %39 = tpu.matmul %37, %38, %cst_32 {dimension_numbers = #tpu.dot_dimension_numbers<[1], [0], [0], [1], [0, 0, 1, 1], [], []>} : vector<16x80xf32>, vector<80x128xf32>, vector<16x128xf32> -> vector<16x128xf32>
    %40 = arith.addf %36, %39 : vector<16x128xf32>
    %c419 = arith.constant 419 : index
    %c0_33 = arith.constant 0 : index
    %41 = vector.load %arg2[%c419, %c0_33] : memref<424x128xf32, #tpu.memory_space<vmem>>, vector<1x128xf32>
    %42 = vector.broadcast %41 : vector<1x128xf32> to vector<16x128xf32>
    %43 = arith.addf %40, %42 : vector<16x128xf32>
    %44 = vector.shape_cast %43 : vector<16x128xf32> to vector<4x4x128xf32>
    %cst_34 = arith.constant dense<0xFF800000> : vector<4x128xf32>
    %45 = vector.multi_reduction <maximumf>, %44, %cst_34 [1] : vector<4x4x128xf32> to vector<4x128xf32>
    %c420 = arith.constant 420 : index
    %c0_35 = arith.constant 0 : index
    %46 = vector.load %arg2[%c420, %c0_35] : memref<424x128xf32, #tpu.memory_space<vmem>>, vector<1x128xf32>
    %47 = vector.broadcast %46 : vector<1x128xf32> to vector<4x128xf32>
    %48 = arith.mulf %45, %47 : vector<4x128xf32>
    %c421 = arith.constant 421 : index
    %c0_36 = arith.constant 0 : index
    %49 = vector.load %arg2[%c421, %c0_36] : memref<424x128xf32, #tpu.memory_space<vmem>>, vector<1x128xf32>
    %50 = vector.broadcast %49 : vector<1x128xf32> to vector<4x128xf32>
    %51 = arith.addf %48, %50 : vector<4x128xf32>
    %cst_37 = arith.constant 0.000000e+00 : f32
    %52 = vector.broadcast %cst_37 : f32 to vector<4x128xf32>
    %53 = arith.maximumf %51, %52 : vector<4x128xf32>
    %cst_38 = arith.constant dense<0.000000e+00> : vector<128xf32>
    %54 = vector.multi_reduction <add>, %53, %cst_38 [0] : vector<4x128xf32> to vector<128xf32>
    %55 = vector.shape_cast %54 : vector<128xf32> to vector<1x128xf32>
    %cst_39 = arith.constant 4.000000e+00 : f32
    %56 = vector.broadcast %cst_39 : f32 to vector<1x128xf32>
    %57 = arith.divf %55, %56 : vector<1x128xf32>
    %c288 = arith.constant 288 : index
    %c0_40 = arith.constant 0 : index
    %58 = vector.load %arg2[%c288, %c0_40] : memref<424x128xf32, #tpu.memory_space<vmem>>, vector<128x80xf32>
    %cst_41 = arith.constant dense<0.000000e+00> : vector<1x80xf32>
    %59 = tpu.matmul %57, %58, %cst_41 {dimension_numbers = #tpu.dot_dimension_numbers<[1], [0], [0], [1], [0, 0, 1, 1], [], []>} : vector<1x128xf32>, vector<128x80xf32>, vector<1x80xf32> -> vector<1x80xf32>
    %60 = vector.extract_strided_slice %59 {offsets = [0, 0], sizes = [1, 10], strides = [1, 1]} : vector<1x80xf32> to vector<1x10xf32>
    %61 = vector.extract_strided_slice %59 {offsets = [0, 10], sizes = [1, 10], strides = [1, 1]} : vector<1x80xf32> to vector<1x10xf32>
    %62 = arith.maximumf %60, %61 : vector<1x10xf32>
    %63 = vector.extract_strided_slice %59 {offsets = [0, 20], sizes = [1, 10], strides = [1, 1]} : vector<1x80xf32> to vector<1x10xf32>
    %64 = arith.maximumf %62, %63 : vector<1x10xf32>
    %65 = vector.extract_strided_slice %59 {offsets = [0, 30], sizes = [1, 10], strides = [1, 1]} : vector<1x80xf32> to vector<1x10xf32>
    %66 = arith.maximumf %64, %65 : vector<1x10xf32>
    %67 = vector.extract_strided_slice %59 {offsets = [0, 40], sizes = [1, 10], strides = [1, 1]} : vector<1x80xf32> to vector<1x10xf32>
    %68 = arith.maximumf %66, %67 : vector<1x10xf32>
    %69 = vector.extract_strided_slice %59 {offsets = [0, 50], sizes = [1, 10], strides = [1, 1]} : vector<1x80xf32> to vector<1x10xf32>
    %70 = arith.maximumf %68, %69 : vector<1x10xf32>
    %71 = vector.extract_strided_slice %59 {offsets = [0, 60], sizes = [1, 10], strides = [1, 1]} : vector<1x80xf32> to vector<1x10xf32>
    %72 = arith.maximumf %70, %71 : vector<1x10xf32>
    %73 = vector.extract_strided_slice %59 {offsets = [0, 70], sizes = [1, 10], strides = [1, 1]} : vector<1x80xf32> to vector<1x10xf32>
    %74 = arith.maximumf %72, %73 : vector<1x10xf32>
    %c422 = arith.constant 422 : index
    %c0_42 = arith.constant 0 : index
    %75 = vector.load %arg2[%c422, %c0_42] : memref<424x128xf32, #tpu.memory_space<vmem>>, vector<1x10xf32>
    %76 = arith.addf %74, %75 : vector<1x10xf32>
    %c0_43 = arith.constant 0 : index
    %c0_44 = arith.constant 0 : index
    %c0_45 = arith.constant 0 : index
    %77 = vector.load %arg3[%c0_43, %c0_44, %c0_45] : memref<1x1x10xf32, #tpu.memory_space<vmem>>, vector<1x1x10xf32>
    %78 = vector.shape_cast %77 : vector<1x1x10xf32> to vector<1x10xf32>
    %79 = vector.shape_cast %76 : vector<1x10xf32> to vector<1x1x10xf32>
    tpu.vector_store %arg3[%c0_43, %c0_44, %c0_45], %79 {strides = array<i32>} : memref<1x1x10xf32, #tpu.memory_space<vmem>>, vector<1x1x10xf32>,
    return
  }
  func.func @transform_0(%arg0: i32) -> (i32, i32, i32) {
    %c0_i32 = arith.constant 0 : i32
    %c0_i32_0 = arith.constant 0 : i32
    %c0_i32_1 = arith.constant 0 : i32
    return %arg0, %c0_i32, %c0_i32_0 : i32, i32, i32
  }
  func.func @transform_1(%arg0: i32) -> (i32, i32) {
    %c0_i32 = arith.constant 0 : i32
    %c0_i32_0 = arith.constant 0 : i32
    %c0_i32_1 = arith.constant 0 : i32
    return %c0_i32, %c0_i32_0 : i32, i32
  }
  func.func @transform_2(%arg0: i32) -> (i32, i32, i32) {
    %c0_i32 = arith.constant 0 : i32
    %c0_i32_0 = arith.constant 0 : i32
    %c0_i32_1 = arith.constant 0 : i32
    return %arg0, %c0_i32, %c0_i32_0 : i32, i32, i32
  }
}

</mosaic_0001>

<llo_original>
// kernel: tile.48
$region0: #{tile.48}
  #allocation0 [shape = 's32[1]{0}', space=sflag, size = 0x4, scoped, tag = 'scoped memory for tile.48']
  %s0 = inlined_call_operand.vmem [shape: f32[16], index: 0, kind: input, shape index: {}]
  %s1 = inlined_call_operand.vmem [shape: f32[8,16], index: 1, kind: output, shape index: {}]
  // Predicated region
  $region2: #{tile.48} parent=0 // pred_check
    _
  $region3: #{tile.48} parent=0 // pred_check_branch
    %3 = sbr.rel (0) target = $region5
  $region4: #{tile.48} parent=0 // pred_region
    _
  $region5: #{tile.48} parent=0 // pred_fallthru
    _
  %v4 = vld [vmem:[%s0] ss:$0 sm:$0xff]
  %5 = vst [vmem:[%s1] sm:$0xff] %v4

// kernel: audio_classifier_forward.1
$region0: #{audio_classifier_forward.1}
  #allocation0 [shape = 'u32[]', space=smem, size = 0x4, offset = 0x4, fixed_abs, tag = 'smem constant byte address 0x4 - core index']
  #allocation1 [shape = 'u32[144,128]{1,0:T(1,128)}', space=vmem, size = 0x12000, scoped, tag = 'internal scratch']
  #allocation2 [shape = 'f32[18,80]{1,0:T(8,128)}', space=vmem, size = 0x3000, scoped, tag = 'scratch operand']
  %s0 = inlined_call_operand.vmem [shape: f32[2,66,10], index: 0, kind: input, shape index: {}]
  %s1 = inlined_call_operand.vmem [shape: f32[424,128], index: 1, kind: input, shape index: {}]
  %s2 = inlined_call_operand.hbm [shape: f32[2,1,10], index: 2, kind: output, shape index: {}]
  %s3 = sld [smem:[#allocation0]]
  $region41: #{audio_classifier_forward.1} parent=0
    _
  %s5 = ssub.s32 1, %s3
  %s6 = scalar_select 0, %s5, %s3
  $region1: #{audio_classifier_forward.1} parent=0
    #allocation3 [shape = 'u8[1024]{0}', space=vmem, size = 0x400, scoped, tag = 'output window, operand 0']
    #allocation4 [shape = 's32[2]{0}', space=sflag, size = 0x8, scoped, tag = 'scoped memory for audio_classifier_forward.1']
    %7 = vsyncpa [#allocation4], 0
    %s8 = scalar_lea.sflag [#allocation4], 1
    %9 = vsyncpa %s8, 0
    loop: start=0, step=1, limit=4
    $region2: #{audio_classifier_forward.1} parent=1 // loop_pre_header
      _
    $region3: #{audio_classifier_forward.1} parent=1 // loop_header
      %s11 = sphi 0, %s15
      %p12 = scmp.ge.s32.totalorder %s11, 4
      %s21 = sphi 0, %s23
      %s24 = sphi 0, %s21
      %s25 = sphi 0, %s24
      %s41 = sphi 0, %s25
      %s45 = sphi 0, %s45
      %s47 = sphi 0, %s45
      %s48 = sphi 0, %s47
      %s62 = sphi 0, %s48
      %s68 = sphi 0, %s70
      %s71 = sphi 0, %s68
      %s72 = sphi 0, %s71
      %s88 = sphi 0, %s72
    $region4: #{audio_classifier_forward.1} parent=1 // loop_header_branch
      %14 = sbr.rel (%p12) target = $region8
    $region5: #{audio_classifier_forward.1} parent=1 // loop_body
      %s16 = ssub.s32 %s11, 1
      %s17 = ssub.s32 %s11, 2
      %s18 = sadd.s32 %s11, 1
      %s19 = ssub.s32 %s11, %s18
      %p20 = scmp.eq.s32.totalorder %s19, 0
      %s22 = sadd.s32 %s21, 1
      %s23 = scalar_select %p20, %s21, %s22
      %p26 = pneg %p20
      %p27 = scmp.eq.s32.totalorder %s11, 1
      %p28 = por %p26, %p27
      %p29 = scmp.ne.s32.totalorder %s21, %s24
      %p30 = scmp.eq.s32.totalorder %s11, 0
      %p31 = por %p29, %p30
      %p32 = scmp.ne.s32.totalorder %s21, %s24
      %p33 = scmp.eq.s32.totalorder %s16, 1
      %p34 = por %p32, %p33
      %p35 = scmp.ne.s32.totalorder %s24, %s25
      %p36 = scmp.eq.s32.totalorder %s16, 0
      %p37 = por %p35, %p36
      %p38 = scmp.ne.s32.totalorder %s24, %s25
      %p39 = scmp.eq.s32.totalorder %s17, 1
      %p40 = por %p38, %p39
      %p42 = scmp.ne.s32.totalorder %s25, %s41
      %p43 = scmp.eq.s32.totalorder %s17, 0
      %p44 = por %p42, %p43
      %s46 = sadd.s32 %s45, 1
      %p49 = scmp.eq.s32.totalorder %s11, 1
      %p50 = scmp.ne.s32.totalorder %s45, %s47
      %p51 = scmp.eq.s32.totalorder %s11, 0
      %p52 = por %p50, %p51
      %p53 = scmp.ne.s32.totalorder %s45, %s47
      %p54 = scmp.eq.s32.totalorder %s16, 1
      %p55 = por %p53, %p54
      %p56 = scmp.ne.s32.totalorder %s47, %s48
      %p57 = scmp.eq.s32.totalorder %s16, 0
      %p58 = por %p56, %p57
      %p59 = scmp.ne.s32.totalorder %s47, %s48
      %p60 = scmp.eq.s32.totalorder %s17, 1
      %p61 = por %p59, %p60
      %p63 = scmp.ne.s32.totalorder %s48, %s62
      %p64 = scmp.eq.s32.totalorder %s17, 0
      %p65 = por %p63, %p64
      %s66 = ssub.s32 %s11, %s18
      %p67 = scmp.eq.s32.totalorder %s66, 0
      %s69 = sadd.s32 %s68, 1
      %s70 = scalar_select %p67, %s68, %s69
      %p73 = pneg %p67
      %p74 = scmp.eq.s32.totalorder %s11, 1
      %p75 = por %p73, %p74
      %p76 = scmp.ne.s32.totalorder %s68, %s71
      %p77 = scmp.eq.s32.totalorder %s11, 0
      %p78 = por %p76, %p77
      %p79 = scmp.ne.s32.totalorder %s68, %s71
      %p80 = scmp.eq.s32.totalorder %s16, 1
      %p81 = por %p79, %p80
      %p82 = scmp.ne.s32.totalorder %s71, %s72
      %p83 = scmp.eq.s32.totalorder %s16, 0
      %p84 = por %p82, %p83
      %p85 = scmp.ne.s32.totalorder %s71, %s72
      %p86 = scmp.eq.s32.totalorder %s17, 1
      %p87 = por %p85, %p86
      %p89 = scmp.ne.s32.totalorder %s72, %s88
      %p90 = scmp.eq.s32.totalorder %s17, 0
      %p91 = por %p89, %p90
      %p92 = scmp.le.s32.totalorder 1, %s11
      %p93 = scmp.lt.s32.totalorder %s11, 3
      %p94 = pnand %p92, %p93
      %p95 = pneg %p94
      // Predicated region
      $region9: #{audio_classifier_forward.1} parent=5 // pred_check
        _
      $region10: #{audio_classifier_forward.1} parent=5 // pred_check_branch
        %97 = sbr.rel (%p94) target = $region12
      $region11: #{audio_classifier_forward.1} parent=5 // pred_region
        %s98 = ssub.s32 %s11, 1
        // Predicated region
        $region13: #{audio_classifier_forward.1} parent=11 // pred_check
          %p99 = pneg %p58
        $region14: #{audio_classifier_forward.1} parent=11 // pred_check_branch
          %101 = sbr.rel (%p99) target = $region16
        $region15: #{audio_classifier_forward.1} parent=11 // pred_region
          _
        $region16: #{audio_classifier_forward.1} parent=11 // pred_fallthru
          _
      $region12: #{audio_classifier_forward.1} parent=5 // pred_fallthru
        _
      %p102 = scmp.lt.s32.totalorder %s11, 2
      // Predicated region
      $region17: #{audio_classifier_forward.1} parent=5 // pred_check
        %p103 = pneg %p102
      $region18: #{audio_classifier_forward.1} parent=5 // pred_check_branch
        %105 = sbr.rel (%p103) target = $region20
      $region19: #{audio_classifier_forward.1} parent=5 // pred_region
        // Predicated region
        $region21: #{audio_classifier_forward.1} parent=19 // pred_check
          %p106 = pneg %p31
        $region22: #{audio_classifier_forward.1} parent=19 // pred_check_branch
          %108 = sbr.rel (%p106) target = $region24
        $region23: #{audio_classifier_forward.1} parent=19 // pred_region
          %p109 = scmp.lt.s32.totalorder %s11, 1
          %s110 = scalar_select %p109, %s11, 1
          %s111 = smul.addr %s110, 9
          %s112 = smul.addr %s111, 8
          %s113 = scalar_lea.vmem %s0, %s112
        $region24: #{audio_classifier_forward.1} parent=19 // pred_fallthru
          _
      $region20: #{audio_classifier_forward.1} parent=5 // pred_fallthru
        _
      %p114 = scmp.le.s32.totalorder 1, %s11
      %p115 = scmp.lt.s32.totalorder %s11, 3
      %p116 = pnand %p114, %p115
      %p117 = pneg %p116
      // Predicated region
      $region25: #{audio_classifier_forward.1} parent=5 // pred_check
        _
      $region26: #{audio_classifier_forward.1} parent=5 // pred_check_branch
        %119 = sbr.rel (%p116) target = $region28
      $region27: #{audio_classifier_forward.1} parent=5 // pred_region
        %s120 = ssub.s32 %s11, 1
        %p121 = scmp.lt.s32.totalorder %s16, 1
        %s122 = scalar_select %p121, %s16, 1
        %s123 = smul.addr %s122, 9
        %s124 = smul.addr %s123, 8
        %s125 = scalar_lea.vmem %s0, %s124
        %p126 = pneg %p37
        %p127 = pneg %p34
        %p128 = pneg %p58
        %p129 = pneg %p55
        %p130 = pneg %p84
        %p131 = pneg %p81
        %s132 = sand.u32 %s71, 1
        %s133 = scalar_lea.sflag [#allocation4], %s132
        %s134 = sand.u32 %s71, 1
        %s135 = scalar_lea.vmem [#allocation3], %s134
        %p136 = scmp.lt.s32.totalorder %s16, 1
        %s137 = scalar_select %p136, %s16, 1
        %s138 = smul.addr %s137, 9
        %s139 = smul.addr %s138, 8
        %s140 = scalar_lea.vmem %s0, %s139
        %v141 = vld [vmem:[%s140] sm:$0xff]
        %v142 = vld [vmem:[%s140 + $0x8] sm:$0xff]
        %v143 = vld [vmem:[%s140 + $0x10] sm:$0xff]
        %v144 = vld [vmem:[%s140 + $0x18] sm:$0xff]
        %v145 = vld [vmem:[%s140 + $0x20] sm:$0xff]
        %v146 = vld [vmem:[%s140 + $0x28] sm:$0xff]
        %v147 = vld [vmem:[%s140 + $0x30] sm:$0xff]
        %v148 = vld [vmem:[%s140 + $0x38] sm:$0xff]
        %v149 = vld [vmem:[%s1] sm:$0xff]
        %v150 = vld [vmem:[%s1 + $0x8] sm:$0x3]
        %v151 = vld [vmem:[%s140 + $0x1] sm:$0xff]
        %v152 = vld [vmem:[%s140 + $0x9] sm:$0xff]
        %v153 = vld [vmem:[%s140 + $0x11] sm:$0xff]
        %v154 = vld [vmem:[%s140 + $0x19] sm:$0xff]
        %v155 = vld [vmem:[%s140 + $0x21] sm:$0xff]
        %v156 = vld [vmem:[%s140 + $0x29] sm:$0xff]
        %v157 = vld [vmem:[%s140 + $0x31] sm:$0xff]
        %v158 = vld [vmem:[%s140 + $0x39] sm:$0xff]
        %v159 = vld [vmem:[%s1 + $0x10] sm:$0xff]
        %v160 = vld [vmem:[%s1 + $0x18] sm:$0x3]
        %vm161 = vcmask 80896
        %v163 = vsel %vm161, %v151, 0
        %v166 = vsel %vm161, %v152, 0
        %v169 = vsel %vm161, %v153, 0
        %v172 = vsel %vm161, %v154, 0
        %v175 = vsel %vm161, %v155, 0
        %v178 = vsel %vm161, %v156, 0
        %v181 = vsel %vm161, %v157, 0
        %v184 = vsel %vm161, %v158, 0
        %vm186 = vcmask 1041408
        %v188 = vsel %vm186, %v160, 0
        %190 = vmatprep.subr.mxu0 0.0
        %191 = vmatpush1.msra.mxu0 0.0
        %192 = vmatprep.subr.mxu0 0.0
        %193 = vmatpush1.msra.mxu0 0.0
        %194 = vmatprep.subr.mxu0 0.0
        %195 = vmatpush1.msra.mxu0 0.0
        %196 = vmatprep.subr.mxu0 0.0
        %197 = vmatpush1.msra.mxu0 0.0
        %198 = vmatprep.subr.mxu0 0.0
        %199 = vmatpush1.msra.mxu0 0.0
        %200 = vmatprep.subr.mxu0 0.0
        %201 = vmatpush1.msra.mxu0 0.0
        %202 = vmatprep.subr.mxu0 0.0
        %203 = vmatpush1.msra.mxu0 0.0
        %204 = vmatprep.subr.mxu0 0.0
        %205 = vmatpush1.msra.mxu0 0.0
        %206 = vmatprep.subr.mxu0 0.0
        %207 = vmatpush1.msra.mxu0 0.0
        %208 = vmatprep.subr.mxu0 0.0
        %209 = vmatpush1.msra.mxu0 0.0
        %210 = vmatprep.subr.mxu0 0.0
        %211 = vmatpush1.msra.mxu0 0.0
        %212 = vmatprep.subr.mxu0 0.0
        %213 = vmatpush1.msra.mxu0 0.0
        %214 = vmatprep.subr.mxu0 0.0
        %215 = vmatpush1.msra.mxu0 0.0
        %216 = vmatprep.subr.mxu0 0.0
        %217 = vmatpush1.msra.mxu0 0.0
        %218 = vmatprep.subr.mxu0 0.0
        %219 = vmatpush1.msra.mxu0 %v188
        %220 = vmatprep.subr.mxu0 0.0
        %221 = vmatpush1.msra.mxu0 %v159
        %222 = vmatprep.subr.mxu0 0.0
        %223 = vmatpush2.msra.mxu0 0.0
        %224 = vmatprep.subr.mxu0 0.0
        %225 = vmatpush2.msra.mxu0 0.0
        %226 = vmatprep.subr.mxu0 0.0
        %227 = vmatpush2.msra.mxu0 0.0
        %228 = vmatprep.subr.mxu0 0.0
        %229 = vmatpush2.msra.mxu0 0.0
        %230 = vmatprep.subr.mxu0 0.0
        %231 = vmatpush2.msra.mxu0 0.0
        %232 = vmatprep.subr.mxu0 0.0
        %233 = vmatpush2.msra.mxu0 0.0
        %234 = vmatprep.subr.mxu0 0.0
        %235 = vmatpush2.msra.mxu0 0.0
        %236 = vmatprep.subr.mxu0 0.0
        %237 = vmatpush2.msra.mxu0 0.0
        %238 = vmatprep.subr.mxu0 0.0
        %239 = vmatpush2.msra.mxu0 0.0
        %240 = vmatprep.subr.mxu0 0.0
        %241 = vmatpush2.msra.mxu0 0.0
        %242 = vmatprep.subr.mxu0 0.0
        %243 = vmatpush2.msra.mxu0 0.0
        %244 = vmatprep.subr.mxu0 0.0
        %245 = vmatpush2.msra.mxu0 0.0
        %246 = vmatprep.subr.mxu0 0.0
        %247 = vmatpush2.msra.mxu0 0.0
        %248 = vmatprep.subr.mxu0 0.0
        %249 = vmatpush2.msra.mxu0 0.0
        %250 = vmatprep.subr.mxu0 0.0
        %251 = vmatpush2.msra.mxu0 0.0
        %252 = vmatprep.subr.mxu0 0.0
        %253 = vmatpush2.msra.mxu0 0.0
        %254 = vmatprep.mubr.f32.mxu0 0.0
        %255 = vmatmul.mubr.f32.gmra.mxu0 %v163
        %v256 = vpop.f32.mrf.mxu0
        %v257 = vadd.f32 0.0, %v256
        %v258 = vpop.f32.mrf.mxu0
        %259 = vmatprep.mubr.f32.mxu0 0.0
        %260 = vmatmul.mubr.f32.gmra.mxu0 %v166
        %v261 = vpop.f32.mrf.mxu0
        %v262 = vadd.f32 0.0, %v261
        %v263 = vpop.f32.mrf.mxu0
        %264 = vmatprep.mubr.f32.mxu0 0.0
        %265 = vmatmul.mubr.f32.gmra.mxu0 %v169
        %v266 = vpop.f32.mrf.mxu0
        %v267 = vadd.f32 0.0, %v266
        %v268 = vpop.f32.mrf.mxu0
        %269 = vmatprep.mubr.f32.mxu0 0.0
        %270 = vmatmul.mubr.f32.gmra.mxu0 %v172
        %v271 = vpop.f32.mrf.mxu0
        %v272 = vadd.f32 0.0, %v271
        %v273 = vpop.f32.mrf.mxu0
        %274 = vmatprep.mubr.f32.mxu0 0.0
        %275 = vmatmul.mubr.f32.gmra.mxu0 %v175
        %v276 = vpop.f32.mrf.mxu0
        %v277 = vadd.f32 0.0, %v276
        %v278 = vpop.f32.mrf.mxu0
        %279 = vmatprep.mubr.f32.mxu0 0.0
        %280 = vmatmul.mubr.f32.gmra.mxu0 %v178
        %v281 = vpop.f32.mrf.mxu0
        %v282 = vadd.f32 0.0, %v281
        %v283 = vpop.f32.mrf.mxu0
        %284 = vmatprep.mubr.f32.mxu0 0.0
        %285 = vmatmul.mubr.f32.gmra.mxu0 %v181
        %v286 = vpop.f32.mrf.mxu0
        %v287 = vadd.f32 0.0, %v286
        %v288 = vpop.f32.mrf.mxu0
        %289 = vmatprep.mubr.f32.mxu0 0.0
        %290 = vmatmul.mubr.f32.gmra.mxu0 %v184
        %v291 = vpop.f32.mrf.mxu0
        %v292 = vadd.f32 0.0, %v291
        %v293 = vpop.f32.mrf.mxu0
        %294 = vdwg.mxu0
        %v296 = vsel %vm161, %v141, 0
        %v299 = vsel %vm161, %v142, 0
        %v302 = vsel %vm161, %v143, 0
        %v305 = vsel %vm161, %v144, 0
        %v308 = vsel %vm161, %v145, 0
        %v311 = vsel %vm161, %v146, 0
        %v314 = vsel %vm161, %v147, 0
        %v317 = vsel %vm161, %v148, 0
        %v320 = vsel %vm186, %v150, 0
        %322 = vmatprep.subr.mxu0 0.0
        %323 = vmatpush1.msra.mxu0 0.0
        %324 = vmatprep.subr.mxu0 0.0
        %325 = vmatpush1.msra.mxu0 0.0
        %326 = vmatprep.subr.mxu0 0.0
        %327 = vmatpush1.msra.mxu0 0.0
        %328 = vmatprep.subr.mxu0 0.0
        %329 = vmatpush1.msra.mxu0 0.0
        %330 = vmatprep.subr.mxu0 0.0
        %331 = vmatpush1.msra.mxu0 0.0
        %332 = vmatprep.subr.mxu0 0.0
        %333 = vmatpush1.msra.mxu0 0.0
        %334 = vmatprep.subr.mxu0 0.0
        %335 = vmatpush1.msra.mxu0 0.0
        %336 = vmatprep.subr.mxu0 0.0
        %337 = vmatpush1.msra.mxu0 0.0
        %338 = vmatprep.subr.mxu0 0.0
        %339 = vmatpush1.msra.mxu0 0.0
        %340 = vmatprep.subr.mxu0 0.0
        %341 = vmatpush1.msra.mxu0 0.0
        %342 = vmatprep.subr.mxu0 0.0
        %343 = vmatpush1.msra.mxu0 0.0
        %344 = vmatprep.subr.mxu0 0.0
        %345 = vmatpush1.msra.mxu0 0.0
        %346 = vmatprep.subr.mxu0 0.0
        %347 = vmatpush1.msra.mxu0 0.0
        %348 = vmatprep.subr.mxu0 0.0
        %349 = vmatpush1.msra.mxu0 0.0
        %350 = vmatprep.subr.mxu0 0.0
        %351 = vmatpush1.msra.mxu0 %v320
        %352 = vmatprep.subr.mxu0 0.0
        %353 = vmatpush1.msra.mxu0 %v149
        %354 = vmatprep.subr.mxu0 0.0
        %355 = vmatpush2.msra.mxu0 0.0
        %356 = vmatprep.subr.mxu0 0.0
        %357 = vmatpush2.msra.mxu0 0.0
        %358 = vmatprep.subr.mxu0 0.0
        %359 = vmatpush2.msra.mxu0 0.0
        %360 = vmatprep.subr.mxu0 0.0
        %361 = vmatpush2.msra.mxu0 0.0
        %362 = vmatprep.subr.mxu0 0.0
        %363 = vmatpush2.msra.mxu0 0.0
        %364 = vmatprep.subr.mxu0 0.0
        %365 = vmatpush2.msra.mxu0 0.0
        %366 = vmatprep.subr.mxu0 0.0
        %367 = vmatpush2.msra.mxu0 0.0
        %368 = vmatprep.subr.mxu0 0.0
        %369 = vmatpush2.msra.mxu0 0.0
        %370 = vmatprep.subr.mxu0 0.0
        %371 = vmatpush2.msra.mxu0 0.0
        %372 = vmatprep.subr.mxu0 0.0
        %373 = vmatpush2.msra.mxu0 0.0
        %374 = vmatprep.subr.mxu0 0.0
        %375 = vmatpush2.msra.mxu0 0.0
        %376 = vmatprep.subr.mxu0 0.0
        %377 = vmatpush2.msra.mxu0 0.0
        %378 = vmatprep.subr.mxu0 0.0
        %379 = vmatpush2.msra.mxu0 0.0
        %380 = vmatprep.subr.mxu0 0.0
        %381 = vmatpush2.msra.mxu0 0.0
        %382 = vmatprep.subr.mxu0 0.0
        %383 = vmatpush2.msra.mxu0 0.0
        %384 = vmatprep.subr.mxu0 0.0
        %385 = vmatpush2.msra.mxu0 0.0
        %386 = vmatprep.mubr.f32.mxu0 0.0
        %387 = vmatmul.mubr.f32.gmra.mxu0 %v296
        %v388 = vpop.f32.mrf.mxu0
        %v389 = vadd.f32 %v257, %v388
        %v390 = vpop.f32.mrf.mxu0
        %391 = vmatprep.mubr.f32.mxu0 0.0
        %392 = vmatmul.mubr.f32.gmra.mxu0 %v299
        %v393 = vpop.f32.mrf.mxu0
        %v394 = vadd.f32 %v262, %v393
        %v395 = vpop.f32.mrf.mxu0
        %396 = vmatprep.mubr.f32.mxu0 0.0
        %397 = vmatmul.mubr.f32.gmra.mxu0 %v302
        %v398 = vpop.f32.mrf.mxu0
        %v399 = vadd.f32 %v267, %v398
        %v400 = vpop.f32.mrf.mxu0
        %401 = vmatprep.mubr.f32.mxu0 0.0
        %402 = vmatmul.mubr.f32.gmra.mxu0 %v305
        %v403 = vpop.f32.mrf.mxu0
        %v404 = vadd.f32 %v272, %v403
        %v405 = vpop.f32.mrf.mxu0
        %406 = vmatprep.mubr.f32.mxu0 0.0
        %407 = vmatmul.mubr.f32.gmra.mxu0 %v308
        %v408 = vpop.f32.mrf.mxu0
        %v409 = vadd.f32 %v277, %v408
        %v410 = vpop.f32.mrf.mxu0
        %411 = vmatprep.mubr.f32.mxu0 0.0
        %412 = vmatmul.mubr.f32.gmra.mxu0 %v311
        %v413 = vpop.f32.mrf.mxu0
        %v414 = vadd.f32 %v282, %v413
        %v415 = vpop.f32.mrf.mxu0
        %416 = vmatprep.mubr.f32.mxu0 0.0
        %417 = vmatmul.mubr.f32.gmra.mxu0 %v314
        %v418 = vpop.f32.mrf.mxu0
        %v419 = vadd.f32 %v287, %v418
        %v420 = vpop.f32.mrf.mxu0
        %421 = vmatprep.mubr.f32.mxu0 0.0
        %422 = vmatmul.mubr.f32.gmra.mxu0 %v317
        %v423 = vpop.f32.mrf.mxu0
        %v424 = vadd.f32 %v292, %v423
        %v425 = vpop.f32.mrf.mxu0
        %426 = vdwg.mxu0
        %v427 = vld [vmem:[%s140 + $0x2] sm:$0xff]
        %v428 = vld [vmem:[%s140 + $0xa] sm:$0xff]
        %v429 = vld [vmem:[%s140 + $0x12] sm:$0xff]
        %v430 = vld [vmem:[%s140 + $0x1a] sm:$0xff]
        %v431 = vld [vmem:[%s140 + $0x22] sm:$0xff]
        %v432 = vld [vmem:[%s140 + $0x2a] sm:$0xff]
        %v433 = vld [vmem:[%s140 + $0x32] sm:$0xff]
        %v434 = vld [vmem:[%s140 + $0x3a] sm:$0xff]
        %v435 = vld [vmem:[%s1 + $0x20] sm:$0xff]
        %v436 = vld [vmem:[%s1 + $0x28] sm:$0x3]
        %v438 = vsel %vm161, %v427, 0
        %v441 = vsel %vm161, %v428, 0
        %v444 = vsel %vm161, %v429, 0
        %v447 = vsel %vm161, %v430, 0
        %v450 = vsel %vm161, %v431, 0
        %v453 = vsel %vm161, %v432, 0
        %v456 = vsel %vm161, %v433, 0
        %v459 = vsel %vm161, %v434, 0
        %v462 = vsel %vm186, %v436, 0
        %464 = vmatprep.subr.mxu0 0.0
        %465 = vmatpush1.msra.mxu0 0.0
        %466 = vmatprep.subr.mxu0 0.0
        %467 = vmatpush1.msra.mxu0 0.0
        %468 = vmatprep.subr.mxu0 0.0
        %469 = vmatpush1.msra.mxu0 0.0
        %470 = vmatprep.subr.mxu0 0.0
        %471 = vmatpush1.msra.mxu0 0.0
        %472 = vmatprep.subr.mxu0 0.0
        %473 = vmatpush1.msra.mxu0 0.0
        %474 = vmatprep.subr.mxu0 0.0
        %475 = vmatpush1.msra.mxu0 0.0
        %476 = vmatprep.subr.mxu0 0.0
        %477 = vmatpush1.msra.mxu0 0.0
        %478 = vmatprep.subr.mxu0 0.0
        %479 = vmatpush1.msra.mxu0 0.0
        %480 = vmatprep.subr.mxu0 0.0
        %481 = vmatpush1.msra.mxu0 0.0
        %482 = vmatprep.subr.mxu0 0.0
        %483 = vmatpush1.msra.mxu0 0.0
        %484 = vmatprep.subr.mxu0 0.0
        %485 = vmatpush1.msra.mxu0 0.0
        %486 = vmatprep.subr.mxu0 0.0
        %487 = vmatpush1.msra.mxu0 0.0
        %488 = vmatprep.subr.mxu0 0.0
        %489 = vmatpush1.msra.mxu0 0.0
        %490 = vmatprep.subr.mxu0 0.0
        %491 = vmatpush1.msra.mxu0 0.0
        %492 = vmatprep.subr.mxu0 0.0
        %493 = vmatpush1.msra.mxu0 %v462
        %494 = vmatprep.subr.mxu0 0.0
        %495 = vmatpush1.msra.mxu0 %v435
        %496 = vmatprep.subr.mxu0 0.0
        %497 = vmatpush2.msra.mxu0 0.0
        %498 = vmatprep.subr.mxu0 0.0
        %499 = vmatpush2.msra.mxu0 0.0
        %500 = vmatprep.subr.mxu0 0.0
        %501 = vmatpush2.msra.mxu0 0.0
        %502 = vmatprep.subr.mxu0 0.0
        %503 = vmatpush2.msra.mxu0 0.0
        %504 = vmatprep.subr.mxu0 0.0
        %505 = vmatpush2.msra.mxu0 0.0
        %506 = vmatprep.subr.mxu0 0.0
        %507 = vmatpush2.msra.mxu0 0.0
        %508 = vmatprep.subr.mxu0 0.0
        %509 = vmatpush2.msra.mxu0 0.0
        %510 = vmatprep.subr.mxu0 0.0
        %511 = vmatpush2.msra.mxu0 0.0
        %512 = vmatprep.subr.mxu0 0.0
        %513 = vmatpush2.msra.mxu0 0.0
        %514 = vmatprep.subr.mxu0 0.0
        %515 = vmatpush2.msra.mxu0 0.0
        %516 = vmatprep.subr.mxu0 0.0
        %517 = vmatpush2.msra.mxu0 0.0
        %518 = vmatprep.subr.mxu0 0.0
        %519 = vmatpush2.msra.mxu0 0.0
        %520 = vmatprep.subr.mxu0 0.0
        %521 = vmatpush2.msra.mxu0 0.0
        %522 = vmatprep.subr.mxu0 0.0
        %523 = vmatpush2.msra.mxu0 0.0
        %524 = vmatprep.subr.mxu0 0.0
        %525 = vmatpush2.msra.mxu0 0.0
        %526 = vmatprep.subr.mxu0 0.0
        %527 = vmatpush2.msra.mxu0 0.0
        %528 = vmatprep.mubr.f32.mxu0 0.0
        %529 = vmatmul.mubr.f32.gmra.mxu0 %v438
        %v530 = vpop.f32.mrf.mxu0
        %v531 = vadd.f32 0.0, %v530
        %v532 = vpop.f32.mrf.mxu0
        %533 = vmatprep.mubr.f32.mxu0 0.0
        %534 = vmatmul.mubr.f32.gmra.mxu0 %v441
        %v535 = vpop.f32.mrf.mxu0
        %v536 = vadd.f32 0.0, %v535
        %v537 = vpop.f32.mrf.mxu0
        %538 = vmatprep.mubr.f32.mxu0 0.0
        %539 = vmatmul.mubr.f32.gmra.mxu0 %v444
        %v540 = vpop.f32.mrf.mxu0
        %v541 = vadd.f32 0.0, %v540
        %v542 = vpop.f32.mrf.mxu0
        %543 = vmatprep.mubr.f32.mxu0 0.0
        %544 = vmatmul.mubr.f32.gmra.mxu0 %v447
        %v545 = vpop.f32.mrf.mxu0
        %v546 = vadd.f32 0.0, %v545
        %v547 = vpop.f32.mrf.mxu0
        %548 = vmatprep.mubr.f32.mxu0 0.0
        %549 = vmatmul.mubr.f32.gmra.mxu0 %v450
        %v550 = vpop.f32.mrf.mxu0
        %v551 = vadd.f32 0.0, %v550
        %v552 = vpop.f32.mrf.mxu0
        %553 = vmatprep.mubr.f32.mxu0 0.0
        %554 = vmatmul.mubr.f32.gmra.mxu0 %v453
        %v555 = vpop.f32.mrf.mxu0
        %v556 = vadd.f32 0.0, %v555
        %v557 = vpop.f32.mrf.mxu0
        %558 = vmatprep.mubr.f32.mxu0 0.0
        %559 = vmatmul.mubr.f32.gmra.mxu0 %v456
        %v560 = vpop.f32.mrf.mxu0
        %v561 = vadd.f32 0.0, %v560
        %v562 = vpop.f32.mrf.mxu0
        %563 = vmatprep.mubr.f32.mxu0 0.0
        %564 = vmatmul.mubr.f32.gmra.mxu0 %v459
        %v565 = vpop.f32.mrf.mxu0
        %v566 = vadd.f32 0.0, %v565
        %v567 = vpop.f32.mrf.mxu0
        %568 = vdwg.mxu0
        %v569 = vadd.f32 %v389, %v531
        %v570 = vadd.f32 %v394, %v536
        %v571 = vadd.f32 %v399, %v541
        %v572 = vadd.f32 %v404, %v546
        %v573 = vadd.f32 %v409, %v551
        %v574 = vadd.f32 %v414, %v556
        %v575 = vadd.f32 %v419, %v561
        %v576 = vadd.f32 %v424, %v566
        %v577 = vld [vmem:[%s1 + $0x1a0] sm:$0x1]
        %v578 = vlaneseq
        %v579 = vshrl.u32 %v578, 7
        %v580 = vsub.s32 0, %v579
        %v581 = vrot.slane %v577, %v580
        %v582 = vadd.f32 %v569, %v581
        %v583 = vadd.f32 %v570, %v581
        %v584 = vadd.f32 %v571, %v581
        %v585 = vadd.f32 %v572, %v581
        %v586 = vadd.f32 %v573, %v581
        %v587 = vadd.f32 %v574, %v581
        %v588 = vadd.f32 %v575, %v581
        %v589 = vadd.f32 %v576, %v581
        %v598 = vcombine.high %v582, %v582
        %v599 = vcombine.high %v583, %v583
        %v600 = vcombine.high %v584, %v584
        %v601 = vcombine.high %v585, %v585
        %v602 = vcombine.high %v586, %v586
        %v603 = vcombine.high %v587, %v587
        %v604 = vcombine.high %v588, %v588
        %v605 = vcombine.high %v589, %v589
        %vm614 = vcmask 519168
        %v615 = vsel %vm614, %v582, -inf
        %v616 = vrot.slane %v615, 4
        %v617 = vmax.f32 %v615, %v616
        %v618 = vrot.slane %v617, 2
        %v619 = vmax.f32 %v617, %v618
        %v620 = vrot.slane %v619, 1
        %v621 = vmax.f32 %v619, %v620
        %v622 = vsel %vm614, %v598, -inf
        %v623 = vrot.slane %v622, 4
        %v624 = vmax.f32 %v622, %v623
        %v625 = vrot.slane %v624, 2
        %v626 = vmax.f32 %v624, %v625
        %v627 = vrot.slane %v626, 1
        %v628 = vmax.f32 %v626, %v627
        %v629 = vsel %vm614, %v583, -inf
        %v630 = vrot.slane %v629, 4
        %v631 = vmax.f32 %v629, %v630
        %v632 = vrot.slane %v631, 2
        %v633 = vmax.f32 %v631, %v632
        %v634 = vrot.slane %v633, 1
        %v635 = vmax.f32 %v633, %v634
        %v636 = vsel %vm614, %v599, -inf
        %v637 = vrot.slane %v636, 4
        %v638 = vmax.f32 %v636, %v637
        %v639 = vrot.slane %v638, 2
        %v640 = vmax.f32 %v638, %v639
        %v641 = vrot.slane %v640, 1
        %v642 = vmax.f32 %v640, %v641
        %v643 = vsel %vm614, %v584, -inf
        %v644 = vrot.slane %v643, 4
        %v645 = vmax.f32 %v643, %v644
        %v646 = vrot.slane %v645, 2
        %v647 = vmax.f32 %v645, %v646
        %v648 = vrot.slane %v647, 1
        %v649 = vmax.f32 %v647, %v648
        %v650 = vsel %vm614, %v600, -inf
        %v651 = vrot.slane %v650, 4
        %v652 = vmax.f32 %v650, %v651
        %v653 = vrot.slane %v652, 2
        %v654 = vmax.f32 %v652, %v653
        %v655 = vrot.slane %v654, 1
        %v656 = vmax.f32 %v654, %v655
        %v657 = vsel %vm614, %v585, -inf
        %v658 = vrot.slane %v657, 4
        %v659 = vmax.f32 %v657, %v658
        %v660 = vrot.slane %v659, 2
        %v661 = vmax.f32 %v659, %v660
        %v662 = vrot.slane %v661, 1
        %v663 = vmax.f32 %v661, %v662
        %v664 = vsel %vm614, %v601, -inf
        %v665 = vrot.slane %v664, 4
        %v666 = vmax.f32 %v664, %v665
        %v667 = vrot.slane %v666, 2
        %v668 = vmax.f32 %v666, %v667
        %v669 = vrot.slane %v668, 1
        %v670 = vmax.f32 %v668, %v669
        %v671 = vsel %vm614, %v586, -inf
        %v672 = vrot.slane %v671, 4
        %v673 = vmax.f32 %v671, %v672
        %v674 = vrot.slane %v673, 2
        %v675 = vmax.f32 %v673, %v674
        %v676 = vrot.slane %v675, 1
        %v677 = vmax.f32 %v675, %v676
        %v678 = vsel %vm614, %v602, -inf
        %v679 = vrot.slane %v678, 4
        %v680 = vmax.f32 %v678, %v679
        %v681 = vrot.slane %v680, 2
        %v682 = vmax.f32 %v680, %v681
        %v683 = vrot.slane %v682, 1
        %v684 = vmax.f32 %v682, %v683
        %v685 = vsel %vm614, %v587, -inf
        %v686 = vrot.slane %v685, 4
        %v687 = vmax.f32 %v685, %v686
        %v688 = vrot.slane %v687, 2
        %v689 = vmax.f32 %v687, %v688
        %v690 = vrot.slane %v689, 1
        %v691 = vmax.f32 %v689, %v690
        %v692 = vsel %vm614, %v603, -inf
        %v693 = vrot.slane %v692, 4
        %v694 = vmax.f32 %v692, %v693
        %v695 = vrot.slane %v694, 2
        %v696 = vmax.f32 %v694, %v695
        %v697 = vrot.slane %v696, 1
        %v698 = vmax.f32 %v696, %v697
        %v699 = vsel %vm614, %v588, -inf
        %v700 = vrot.slane %v699, 4
        %v701 = vmax.f32 %v699, %v700
        %v702 = vrot.slane %v701, 2
        %v703 = vmax.f32 %v701, %v702
        %v704 = vrot.slane %v703, 1
        %v705 = vmax.f32 %v703, %v704
        %v706 = vsel %vm614, %v604, -inf
        %v707 = vrot.slane %v706, 4
        %v708 = vmax.f32 %v706, %v707
        %v709 = vrot.slane %v708, 2
        %v710 = vmax.f32 %v708, %v709
        %v711 = vrot.slane %v710, 1
        %v712 = vmax.f32 %v710, %v711
        %v713 = vsel %vm614, %v589, -inf
        %v714 = vrot.slane %v713, 4
        %v715 = vmax.f32 %v713, %v714
        %v716 = vrot.slane %v715, 2
        %v717 = vmax.f32 %v715, %v716
        %v718 = vrot.slane %v717, 1
        %v719 = vmax.f32 %v717, %v718
        %v720 = vsel %vm614, %v605, -inf
        %v721 = vrot.slane %v720, 4
        %v722 = vmax.f32 %v720, %v721
        %v723 = vrot.slane %v722, 2
        %v724 = vmax.f32 %v722, %v723
        %v725 = vrot.slane %v724, 1
        %v726 = vmax.f32 %v724, %v725
        %v727 = vld [vmem:[%s1 + $0x1a1] sm:$0x1]
        %v728 = vlaneseq
        %v729 = vshrl.u32 %v728, 7
        %v730 = vsub.s32 0, %v729
        %v731 = vrot.slane %v727, %v730
        %v732 = vmul.f32 %v621, %v731
        %v733 = vmul.f32 %v628, %v731
        %v734 = vmul.f32 %v635, %v731
        %v735 = vmul.f32 %v642, %v731
        %v736 = vmul.f32 %v649, %v731
        %v737 = vmul.f32 %v656, %v731
        %v738 = vmul.f32 %v663, %v731
        %v739 = vmul.f32 %v670, %v731
        %v740 = vmul.f32 %v677, %v731
        %v741 = vmul.f32 %v684, %v731
        %v742 = vmul.f32 %v691, %v731
        %v743 = vmul.f32 %v698, %v731
        %v744 = vmul.f32 %v705, %v731
        %v745 = vmul.f32 %v712, %v731
        %v746 = vmul.f32 %v719, %v731
        %v747 = vmul.f32 %v726, %v731
        %v748 = vld [vmem:[%s1 + $0x1a2] sm:$0x1]
        %v749 = vlaneseq
        %v750 = vshrl.u32 %v749, 7
        %v751 = vsub.s32 0, %v750
        %v752 = vrot.slane %v748, %v751
        %v753 = vadd.f32 %v732, %v752
        %v754 = vadd.f32 %v733, %v752
        %v755 = vadd.f32 %v734, %v752
        %v756 = vadd.f32 %v735, %v752
        %v757 = vadd.f32 %v736, %v752
        %v758 = vadd.f32 %v737, %v752
        %v759 = vadd.f32 %v738, %v752
        %v760 = vadd.f32 %v739, %v752
        %v761 = vadd.f32 %v740, %v752
        %v762 = vadd.f32 %v741, %v752
        %v763 = vadd.f32 %v742, %v752
        %v764 = vadd.f32 %v743, %v752
        %v765 = vadd.f32 %v744, %v752
        %v766 = vadd.f32 %v745, %v752
        %v767 = vadd.f32 %v746, %v752
        %v768 = vadd.f32 %v747, %v752
        %v769 = vmax.f32 %v753, 0.0
        %v770 = vmax.f32 %v754, 0.0
        %v771 = vmax.f32 %v755, 0.0
        %v772 = vmax.f32 %v756, 0.0
        %v773 = vmax.f32 %v757, 0.0
        %v774 = vmax.f32 %v758, 0.0
        %v775 = vmax.f32 %v759, 0.0
        %v776 = vmax.f32 %v760, 0.0
        %v777 = vmax.f32 %v761, 0.0
        %v778 = vmax.f32 %v762, 0.0
        %v779 = vmax.f32 %v763, 0.0
        %v780 = vmax.f32 %v764, 0.0
        %v781 = vmax.f32 %v765, 0.0
        %v782 = vmax.f32 %v766, 0.0
        %v783 = vmax.f32 %v767, 0.0
        %v784 = vmax.f32 %v768, 0.0
        %vm785 = vcmask 654336
        %786 = vst.msk [vmem:[#allocation2] sm:$0xff] %vm785, 0.0
        %787 = vst.msk [vmem:[#allocation2 + $0x8] sm:$0xff] %vm785, 0.0
        %vm788 = vcmask 648192
        %789 = vst.msk [vmem:[#allocation2 + $0x10] sm:$0x3] %vm788, 0.0
        %v806 = vrot.slane %v770, 7
        %vm807 = vcmask 1041409
        %v808 = vsel %vm807, %v806, %v769
        %v809 = vrot.slane %v771, 6
        %vm810 = vcmask 1042434
        %v811 = vsel %vm810, %v809, %v808
        %v812 = vrot.slane %v772, 5
        %vm813 = vcmask 1043459
        %v814 = vsel %vm813, %v812, %v811
        %v815 = vrot.slane %v773, 4
        %vm816 = vcmask 1044484
        %v817 = vsel %vm816, %v815, %v814
        %v818 = vrot.slane %v774, 3
        %vm819 = vcmask 1045509
        %v820 = vsel %vm819, %v818, %v817
        %v821 = vrot.slane %v775, 2
        %vm822 = vcmask 1046534
        %v823 = vsel %vm822, %v821, %v820
        %v824 = vrot.slane %v776, 1
        %vm825 = vcmask 1047559
        %v826 = vsel %vm825, %v824, %v823
        %v827 = vrot.slane %v778, 7
        %v828 = vsel %vm807, %v827, %v777
        %v829 = vrot.slane %v779, 6
        %v830 = vsel %vm810, %v829, %v828
        %v831 = vrot.slane %v780, 5
        %v832 = vsel %vm813, %v831, %v830
        %v833 = vrot.slane %v781, 4
        %v834 = vsel %vm816, %v833, %v832
        %v835 = vrot.slane %v782, 3
        %v836 = vsel %vm819, %v835, %v834
        %v837 = vrot.slane %v783, 2
        %v838 = vsel %vm822, %v837, %v836
        %v839 = vrot.slane %v784, 1
        %v840 = vsel %vm825, %v839, %v838
        %841 = vrot.lane.b32.xlu0 %v826, 8
        %v842 = vpop.permute.xlu0 %841
        %843 = vrot.lane.b32.xlu0 %v840, 8
        %v844 = vpop.permute.xlu0 %843
        %vm847 = vcmask 588864
        %848 = vst.msk [vmem:[#allocation2 + $0x1] sm:$0xff] %vm847, %v842
        %849 = vst.msk [vmem:[#allocation2 + $0x9] sm:$0xff] %vm847, %v844
        %v850 = vld [vmem:[#allocation2] sm:$0xff]
        %v851 = vld [vmem:[#allocation2 + $0x8] sm:$0xff]
        %v852 = vld [vmem:[%s1 + $0x30] sm:$0xff]
        %v853 = vld [vmem:[%s1 + $0x38] sm:$0xff]
        %v854 = vld [vmem:[%s1 + $0x40] sm:$0xff]
        %v855 = vld [vmem:[%s1 + $0x48] sm:$0xff]
        %v856 = vld [vmem:[%s1 + $0x50] sm:$0xff]
        %v857 = vld [vmem:[%s1 + $0x58] sm:$0xff]
        %v858 = vld [vmem:[%s1 + $0x60] sm:$0xff]
        %v859 = vld [vmem:[%s1 + $0x68] sm:$0xff]
        %v860 = vld [vmem:[%s1 + $0x70] sm:$0xff]
        %v861 = vld [vmem:[%s1 + $0x78] sm:$0xff]
        %v862 = vld [vmem:[#allocation2 + $0x1] sm:$0xff]
        %v863 = vld [vmem:[#allocation2 + $0x9] sm:$0xff]
        %v864 = vld [vmem:[%s1 + $0x80] sm:$0xff]
        %v865 = vld [vmem:[%s1 + $0x88] sm:$0xff]
        %v866 = vld [vmem:[%s1 + $0x90] sm:$0xff]
        %v867 = vld [vmem:[%s1 + $0x98] sm:$0xff]
        %v868 = vld [vmem:[%s1 + $0xa0] sm:$0xff]
        %v869 = vld [vmem:[%s1 + $0xa8] sm:$0xff]
        %v870 = vld [vmem:[%s1 + $0xb0] sm:$0xff]
        %v871 = vld [vmem:[%s1 + $0xb8] sm:$0xff]
        %v872 = vld [vmem:[%s1 + $0xc0] sm:$0xff]
        %v873 = vld [vmem:[%s1 + $0xc8] sm:$0xff]
        %v875 = vsel %vm785, %v862, 0
        %v878 = vsel %vm785, %v863, 0
        %880 = vmatprep.subr.mxu0 0.0
        %881 = vmatpush1.msra.mxu0 0.0
        %882 = vmatprep.subr.mxu0 0.0
        %883 = vmatpush1.msra.mxu0 0.0
        %884 = vmatprep.subr.mxu0 0.0
        %885 = vmatpush1.msra.mxu0 0.0
        %886 = vmatprep.subr.mxu0 0.0
        %887 = vmatpush1.msra.mxu0 0.0
        %888 = vmatprep.subr.mxu0 0.0
        %889 = vmatpush1.msra.mxu0 0.0
        %890 = vmatprep.subr.mxu0 0.0
        %891 = vmatpush1.msra.mxu0 0.0
        %892 = vmatprep.subr.mxu0 0.0
        %893 = vmatpush1.msra.mxu0 %v873
        %894 = vmatprep.subr.mxu0 0.0
        %895 = vmatpush1.msra.mxu0 %v872
        %896 = vmatprep.subr.mxu0 0.0
        %897 = vmatpush1.msra.mxu0 %v871
        %898 = vmatprep.subr.mxu0 0.0
        %899 = vmatpush1.msra.mxu0 %v870
        %900 = vmatprep.subr.mxu0 0.0
        %901 = vmatpush1.msra.mxu0 %v869
        %902 = vmatprep.subr.mxu0 0.0
        %903 = vmatpush1.msra.mxu0 %v868
        %904 = vmatprep.subr.mxu0 0.0
        %905 = vmatpush1.msra.mxu0 %v867
        %906 = vmatprep.subr.mxu0 0.0
        %907 = vmatpush1.msra.mxu0 %v866
        %908 = vmatprep.subr.mxu0 0.0
        %909 = vmatpush1.msra.mxu0 %v865
        %910 = vmatprep.subr.mxu0 0.0
        %911 = vmatpush1.msra.mxu0 %v864
        %912 = vmatprep.subr.mxu0 0.0
        %913 = vmatpush2.msra.mxu0 0.0
        %914 = vmatprep.subr.mxu0 0.0
        %915 = vmatpush2.msra.mxu0 0.0
        %916 = vmatprep.subr.mxu0 0.0
        %917 = vmatpush2.msra.mxu0 0.0
        %918 = vmatprep.subr.mxu0 0.0
        %919 = vmatpush2.msra.mxu0 0.0
        %920 = vmatprep.subr.mxu0 0.0
        %921 = vmatpush2.msra.mxu0 0.0
        %922 = vmatprep.subr.mxu0 0.0
        %923 = vmatpush2.msra.mxu0 0.0
        %924 = vmatprep.subr.mxu0 0.0
        %925 = vmatpush2.msra.mxu0 0.0
        %926 = vmatprep.subr.mxu0 0.0
        %927 = vmatpush2.msra.mxu0 0.0
        %928 = vmatprep.subr.mxu0 0.0
        %929 = vmatpush2.msra.mxu0 0.0
        %930 = vmatprep.subr.mxu0 0.0
        %931 = vmatpush2.msra.mxu0 0.0
        %932 = vmatprep.subr.mxu0 0.0
        %933 = vmatpush2.msra.mxu0 0.0
        %934 = vmatprep.subr.mxu0 0.0
        %935 = vmatpush2.msra.mxu0 0.0
        %936 = vmatprep.subr.mxu0 0.0
        %937 = vmatpush2.msra.mxu0 0.0
        %938 = vmatprep.subr.mxu0 0.0
        %939 = vmatpush2.msra.mxu0 0.0
        %940 = vmatprep.subr.mxu0 0.0
        %941 = vmatpush2.msra.mxu0 0.0
        %942 = vmatprep.subr.mxu0 0.0
        %943 = vmatpush2.msra.mxu0 0.0
        %944 = vmatprep.mubr.f32.mxu0 0.0
        %945 = vmatmul.mubr.f32.gmra.mxu0 %v875
        %v946 = vpop.f32.mrf.mxu0
        %v947 = vadd.f32 0.0, %v946
        %v948 = vpop.f32.mrf.mxu0
        %949 = vmatprep.mubr.f32.mxu0 0.0
        %950 = vmatmul.mubr.f32.gmra.mxu0 %v878
        %v951 = vpop.f32.mrf.mxu0
        %v952 = vadd.f32 0.0, %v951
        %v953 = vpop.f32.mrf.mxu0
        %954 = vdwg.mxu0
        %v956 = vsel %vm785, %v850, 0
        %v959 = vsel %vm785, %v851, 0
        %961 = vmatprep.subr.mxu0 0.0
        %962 = vmatpush1.msra.mxu0 0.0
        %963 = vmatprep.subr.mxu0 0.0
        %964 = vmatpush1.msra.mxu0 0.0
        %965 = vmatprep.subr.mxu0 0.0
        %966 = vmatpush1.msra.mxu0 0.0
        %967 = vmatprep.subr.mxu0 0.0
        %968 = vmatpush1.msra.mxu0 0.0
        %969 = vmatprep.subr.mxu0 0.0
        %970 = vmatpush1.msra.mxu0 0.0
        %971 = vmatprep.subr.mxu0 0.0
        %972 = vmatpush1.msra.mxu0 0.0
        %973 = vmatprep.subr.mxu0 0.0
        %974 = vmatpush1.msra.mxu0 %v861
        %975 = vmatprep.subr.mxu0 0.0
        %976 = vmatpush1.msra.mxu0 %v860
        %977 = vmatprep.subr.mxu0 0.0
        %978 = vmatpush1.msra.mxu0 %v859
        %979 = vmatprep.subr.mxu0 0.0
        %980 = vmatpush1.msra.mxu0 %v858
        %981 = vmatprep.subr.mxu0 0.0
        %982 = vmatpush1.msra.mxu0 %v857
        %983 = vmatprep.subr.mxu0 0.0
        %984 = vmatpush1.msra.mxu0 %v856
        %985 = vmatprep.subr.mxu0 0.0
        %986 = vmatpush1.msra.mxu0 %v855
        %987 = vmatprep.subr.mxu0 0.0
        %988 = vmatpush1.msra.mxu0 %v854
        %989 = vmatprep.subr.mxu0 0.0
        %990 = vmatpush1.msra.mxu0 %v853
        %991 = vmatprep.subr.mxu0 0.0
        %992 = vmatpush1.msra.mxu0 %v852
        %993 = vmatprep.subr.mxu0 0.0
        %994 = vmatpush2.msra.mxu0 0.0
        %995 = vmatprep.subr.mxu0 0.0
        %996 = vmatpush2.msra.mxu0 0.0
        %997 = vmatprep.subr.mxu0 0.0
        %998 = vmatpush2.msra.mxu0 0.0
        %999 = vmatprep.subr.mxu0 0.0
        %1000 = vmatpush2.msra.mxu0 0.0
        %1001 = vmatprep.subr.mxu0 0.0
        %1002 = vmatpush2.msra.mxu0 0.0
        %1003 = vmatprep.subr.mxu0 0.0
        %1004 = vmatpush2.msra.mxu0 0.0
        %1005 = vmatprep.subr.mxu0 0.0
        %1006 = vmatpush2.msra.mxu0 0.0
        %1007 = vmatprep.subr.mxu0 0.0
        %1008 = vmatpush2.msra.mxu0 0.0
        %1009 = vmatprep.subr.mxu0 0.0
        %1010 = vmatpush2.msra.mxu0 0.0
        %1011 = vmatprep.subr.mxu0 0.0
        %1012 = vmatpush2.msra.mxu0 0.0
        %1013 = vmatprep.subr.mxu0 0.0
        %1014 = vmatpush2.msra.mxu0 0.0
        %1015 = vmatprep.subr.mxu0 0.0
        %1016 = vmatpush2.msra.mxu0 0.0
        %1017 = vmatprep.subr.mxu0 0.0
        %1018 = vmatpush2.msra.mxu0 0.0
        %1019 = vmatprep.subr.mxu0 0.0
        %1020 = vmatpush2.msra.mxu0 0.0
        %1021 = vmatprep.subr.mxu0 0.0
        %1022 = vmatpush2.msra.mxu0 0.0
        %1023 = vmatprep.subr.mxu0 0.0
        %1024 = vmatpush2.msra.mxu0 0.0
        %1025 = vmatprep.mubr.f32.mxu0 0.0
        %1026 = vmatmul.mubr.f32.gmra.mxu0 %v956
        %v1027 = vpop.f32.mrf.mxu0
        %v1028 = vadd.f32 %v947, %v1027
        %v1029 = vpop.f32.mrf.mxu0
        %1030 = vmatprep.mubr.f32.mxu0 0.0
        %1031 = vmatmul.mubr.f32.gmra.mxu0 %v959
        %v1032 = vpop.f32.mrf.mxu0
        %v1033 = vadd.f32 %v952, %v1032
        %v1034 = vpop.f32.mrf.mxu0
        %1035 = vdwg.mxu0
        %v1036 = vld [vmem:[#allocation2 + $0x2] sm:$0xff]
        %v1037 = vld [vmem:[#allocation2 + $0xa] sm:$0xff]
        %v1038 = vld [vmem:[%s1 + $0xd0] sm:$0xff]
        %v1039 = vld [vmem:[%s1 + $0xd8] sm:$0xff]
        %v1040 = vld [vmem:[%s1 + $0xe0] sm:$0xff]
        %v1041 = vld [vmem:[%s1 + $0xe8] sm:$0xff]
        %v1042 = vld [vmem:[%s1 + $0xf0] sm:$0xff]
        %v1043 = vld [vmem:[%s1 + $0xf8] sm:$0xff]
        %v1044 = vld [vmem:[%s1 + $0x100] sm:$0xff]
        %v1045 = vld [vmem:[%s1 + $0x108] sm:$0xff]
        %v1046 = vld [vmem:[%s1 + $0x110] sm:$0xff]
        %v1047 = vld [vmem:[%s1 + $0x118] sm:$0xff]
        %v1049 = vsel %vm785, %v1036, 0
        %v1052 = vsel %vm785, %v1037, 0
        %1054 = vmatprep.subr.mxu0 0.0
        %1055 = vmatpush1.msra.mxu0 0.0
        %1056 = vmatprep.subr.mxu0 0.0
        %1057 = vmatpush1.msra.mxu0 0.0
        %1058 = vmatprep.subr.mxu0 0.0
        %1059 = vmatpush1.msra.mxu0 0.0
        %1060 = vmatprep.subr.mxu0 0.0
        %1061 = vmatpush1.msra.mxu0 0.0
        %1062 = vmatprep.subr.mxu0 0.0
        %1063 = vmatpush1.msra.mxu0 0.0
        %1064 = vmatprep.subr.mxu0 0.0
        %1065 = vmatpush1.msra.mxu0 0.0
        %1066 = vmatprep.subr.mxu0 0.0
        %1067 = vmatpush1.msra.mxu0 %v1047
        %1068 = vmatprep.subr.mxu0 0.0
        %1069 = vmatpush1.msra.mxu0 %v1046
        %1070 = vmatprep.subr.mxu0 0.0
        %1071 = vmatpush1.msra.mxu0 %v1045
        %1072 = vmatprep.subr.mxu0 0.0
        %1073 = vmatpush1.msra.mxu0 %v1044
        %1074 = vmatprep.subr.mxu0 0.0
        %1075 = vmatpush1.msra.mxu0 %v1043
        %1076 = vmatprep.subr.mxu0 0.0
        %1077 = vmatpush1.msra.mxu0 %v1042
        %1078 = vmatprep.subr.mxu0 0.0
        %1079 = vmatpush1.msra.mxu0 %v1041
        %1080 = vmatprep.subr.mxu0 0.0
        %1081 = vmatpush1.msra.mxu0 %v1040
        %1082 = vmatprep.subr.mxu0 0.0
        %1083 = vmatpush1.msra.mxu0 %v1039
        %1084 = vmatprep.subr.mxu0 0.0
        %1085 = vmatpush1.msra.mxu0 %v1038
        %1086 = vmatprep.subr.mxu0 0.0
        %1087 = vmatpush2.msra.mxu0 0.0
        %1088 = vmatprep.subr.mxu0 0.0
        %1089 = vmatpush2.msra.mxu0 0.0
        %1090 = vmatprep.subr.mxu0 0.0
        %1091 = vmatpush2.msra.mxu0 0.0
        %1092 = vmatprep.subr.mxu0 0.0
        %1093 = vmatpush2.msra.mxu0 0.0
        %1094 = vmatprep.subr.mxu0 0.0
        %1095 = vmatpush2.msra.mxu0 0.0
        %1096 = vmatprep.subr.mxu0 0.0
        %1097 = vmatpush2.msra.mxu0 0.0
        %1098 = vmatprep.subr.mxu0 0.0
        %1099 = vmatpush2.msra.mxu0 0.0
        %1100 = vmatprep.subr.mxu0 0.0
        %1101 = vmatpush2.msra.mxu0 0.0
        %1102 = vmatprep.subr.mxu0 0.0
        %1103 = vmatpush2.msra.mxu0 0.0
        %1104 = vmatprep.subr.mxu0 0.0
        %1105 = vmatpush2.msra.mxu0 0.0
        %1106 = vmatprep.subr.mxu0 0.0
        %1107 = vmatpush2.msra.mxu0 0.0
        %1108 = vmatprep.subr.mxu0 0.0
        %1109 = vmatpush2.msra.mxu0 0.0
        %1110 = vmatprep.subr.mxu0 0.0
        %1111 = vmatpush2.msra.mxu0 0.0
        %1112 = vmatprep.subr.mxu0 0.0
        %1113 = vmatpush2.msra.mxu0 0.0
        %1114 = vmatprep.subr.mxu0 0.0
        %1115 = vmatpush2.msra.mxu0 0.0
        %1116 = vmatprep.subr.mxu0 0.0
        %1117 = vmatpush2.msra.mxu0 0.0
        %1118 = vmatprep.mubr.f32.mxu0 0.0
        %1119 = vmatmul.mubr.f32.gmra.mxu0 %v1049
        %v1120 = vpop.f32.mrf.mxu0
        %v1121 = vadd.f32 0.0, %v1120
        %v1122 = vpop.f32.mrf.mxu0
        %1123 = vmatprep.mubr.f32.mxu0 0.0
        %1124 = vmatmul.mubr.f32.gmra.mxu0 %v1052
        %v1125 = vpop.f32.mrf.mxu0
        %v1126 = vadd.f32 0.0, %v1125
        %v1127 = vpop.f32.mrf.mxu0
        %1128 = vdwg.mxu0
        %v1129 = vadd.f32 %v1028, %v1121
        %v1130 = vadd.f32 %v1033, %v1126
        %v1131 = vld [vmem:[%s1 + $0x1a3] sm:$0x1]
        %v1132 = vlaneseq
        %v1133 = vshrl.u32 %v1132, 7
        %v1134 = vsub.s32 0, %v1133
        %v1135 = vrot.slane %v1131, %v1134
        %v1136 = vadd.f32 %v1129, %v1135
        %v1137 = vadd.f32 %v1130, %v1135
        %v1140 = vcombine.high %v1136, %v1136
        %v1141 = vcombine.high %v1137, %v1137
        %vm1144 = vcmask 1043456
        %v1145 = vsel %vm1144, %v1136, -inf
        %v1146 = vrot.slane %v1145, 4
        %v1147 = vmax.f32 %v1145, %v1146
        %v1148 = vrot.slane %v1147, 2
        %v1149 = vmax.f32 %v1147, %v1148
        %v1150 = vrot.slane %v1149, 1
        %v1151 = vmax.f32 %v1149, %v1150
        %v1152 = vsel %vm1144, %v1140, -inf
        %v1153 = vrot.slane %v1152, 4
        %v1154 = vmax.f32 %v1152, %v1153
        %v1155 = vrot.slane %v1154, 2
        %v1156 = vmax.f32 %v1154, %v1155
        %v1157 = vrot.slane %v1156, 1
        %v1158 = vmax.f32 %v1156, %v1157
        %v1159 = vsel %vm1144, %v1137, -inf
        %v1160 = vrot.slane %v1159, 4
        %v1161 = vmax.f32 %v1159, %v1160
        %v1162 = vrot.slane %v1161, 2
        %v1163 = vmax.f32 %v1161, %v1162
        %v1164 = vrot.slane %v1163, 1
        %v1165 = vmax.f32 %v1163, %v1164
        %v1166 = vsel %vm1144, %v1141, -inf
        %v1167 = vrot.slane %v1166, 4
        %v1168 = vmax.f32 %v1166, %v1167
        %v1169 = vrot.slane %v1168, 2
        %v1170 = vmax.f32 %v1168, %v1169
        %v1171 = vrot.slane %v1170, 1
        %v1172 = vmax.f32 %v1170, %v1171
        %v1173 = vld [vmem:[%s1 + $0x1a4] sm:$0x1]
        %v1174 = vlaneseq
        %v1175 = vshrl.u32 %v1174, 7
        %v1176 = vsub.s32 0, %v1175
        %v1177 = vrot.slane %v1173, %v1176
        %v1178 = vmul.f32 %v1151, %v1177
        %v1179 = vmul.f32 %v1158, %v1177
        %v1180 = vmul.f32 %v1165, %v1177
        %v1181 = vmul.f32 %v1172, %v1177
        %v1182 = vld [vmem:[%s1 + $0x1a5] sm:$0x1]
        %v1183 = vlaneseq
        %v1184 = vshrl.u32 %v1183, 7
        %v1185 = vsub.s32 0, %v1184
        %v1186 = vrot.slane %v1182, %v1185
        %v1187 = vadd.f32 %v1178, %v1186
        %v1188 = vadd.f32 %v1179, %v1186
        %v1189 = vadd.f32 %v1180, %v1186
        %v1190 = vadd.f32 %v1181, %v1186
        %v1191 = vmax.f32 %v1187, 0.0
        %v1192 = vmax.f32 %v1188, 0.0
        %v1193 = vmax.f32 %v1189, 0.0
        %v1194 = vmax.f32 %v1190, 0.0
        %v1199 = vrot.slane %v1192, 7
        %v1200 = vsel %vm807, %v1199, %v1191
        %v1201 = vrot.slane %v1193, 6
        %v1202 = vsel %vm810, %v1201, %v1200
        %v1203 = vrot.slane %v1194, 5
        %v1204 = vsel %vm813, %v1203, %v1202
        %v1206 = vsel %vm1144, %v1204, 0.0
        %v1207 = vrot.slane %v1206, 4
        %v1208 = vadd.f32 %v1206, %v1207
        %v1209 = vrot.slane %v1208, 2
        %v1210 = vadd.f32 %v1208, %v1209
        %v1211 = vrot.slane %v1210, 1
        %v1212 = vadd.f32 %v1210, %v1211
        %v1213 = vrcp.pop 4.0
        %v1214 = vmul.f32 %v1212, %v1213
        %v1215 = vld [vmem:[%s1 + $0x120] sm:$0xff]
        %v1216 = vld [vmem:[%s1 + $0x128] sm:$0xff]
        %v1217 = vld [vmem:[%s1 + $0x130] sm:$0xff]
        %v1218 = vld [vmem:[%s1 + $0x138] sm:$0xff]
        %v1219 = vld [vmem:[%s1 + $0x140] sm:$0xff]
        %v1220 = vld [vmem:[%s1 + $0x148] sm:$0xff]
        %v1221 = vld [vmem:[%s1 + $0x150] sm:$0xff]
        %v1222 = vld [vmem:[%s1 + $0x158] sm:$0xff]
        %v1223 = vld [vmem:[%s1 + $0x160] sm:$0xff]
        %v1224 = vld [vmem:[%s1 + $0x168] sm:$0xff]
        %v1225 = vld [vmem:[%s1 + $0x170] sm:$0xff]
        %v1226 = vld [vmem:[%s1 + $0x178] sm:$0xff]
        %v1227 = vld [vmem:[%s1 + $0x180] sm:$0xff]
        %v1228 = vld [vmem:[%s1 + $0x188] sm:$0xff]
        %v1229 = vld [vmem:[%s1 + $0x190] sm:$0xff]
        %v1230 = vld [vmem:[%s1 + $0x198] sm:$0xff]
        %1231 = vmatprep.subr.mxu0 0.0
        %1232 = vmatpush1.msra.mxu0 %v1230
        %1233 = vmatprep.subr.mxu0 0.0
        %1234 = vmatpush1.msra.mxu0 %v1229
        %1235 = vmatprep.subr.mxu0 0.0
        %1236 = vmatpush1.msra.mxu0 %v1228
        %1237 = vmatprep.subr.mxu0 0.0
        %1238 = vmatpush1.msra.mxu0 %v1227
        %1239 = vmatprep.subr.mxu0 0.0
        %1240 = vmatpush1.msra.mxu0 %v1226
        %1241 = vmatprep.subr.mxu0 0.0
        %1242 = vmatpush1.msra.mxu0 %v1225
        %1243 = vmatprep.subr.mxu0 0.0
        %1244 = vmatpush1.msra.mxu0 %v1224
        %1245 = vmatprep.subr.mxu0 0.0
        %1246 = vmatpush1.msra.mxu0 %v1223
        %1247 = vmatprep.subr.mxu0 0.0
        %1248 = vmatpush1.msra.mxu0 %v1222
        %1249 = vmatprep.subr.mxu0 0.0
        %1250 = vmatpush1.msra.mxu0 %v1221
        %1251 = vmatprep.subr.mxu0 0.0
        %1252 = vmatpush1.msra.mxu0 %v1220
        %1253 = vmatprep.subr.mxu0 0.0
        %1254 = vmatpush1.msra.mxu0 %v1219
        %1255 = vmatprep.subr.mxu0 0.0
        %1256 = vmatpush1.msra.mxu0 %v1218
        %1257 = vmatprep.subr.mxu0 0.0
        %1258 = vmatpush1.msra.mxu0 %v1217
        %1259 = vmatprep.subr.mxu0 0.0
        %1260 = vmatpush1.msra.mxu0 %v1216
        %1261 = vmatprep.subr.mxu0 0.0
        %1262 = vmatpush1.msra.mxu0 %v1215
        %1263 = vmatprep.subr.mxu0 0.0
        %1264 = vmatpush2.msra.mxu0 0.0
        %1265 = vmatprep.subr.mxu0 0.0
        %1266 = vmatpush2.msra.mxu0 0.0
        %1267 = vmatprep.subr.mxu0 0.0
        %1268 = vmatpush2.msra.mxu0 0.0
        %1269 = vmatprep.subr.mxu0 0.0
        %1270 = vmatpush2.msra.mxu0 0.0
        %1271 = vmatprep.subr.mxu0 0.0
        %1272 = vmatpush2.msra.mxu0 0.0
        %1273 = vmatprep.subr.mxu0 0.0
        %1274 = vmatpush2.msra.mxu0 0.0
        %1275 = vmatprep.subr.mxu0 0.0
        %1276 = vmatpush2.msra.mxu0 0.0
        %1277 = vmatprep.subr.mxu0 0.0
        %1278 = vmatpush2.msra.mxu0 0.0
        %1279 = vmatprep.subr.mxu0 0.0
        %1280 = vmatpush2.msra.mxu0 0.0
        %1281 = vmatprep.subr.mxu0 0.0
        %1282 = vmatpush2.msra.mxu0 0.0
        %1283 = vmatprep.subr.mxu0 0.0
        %1284 = vmatpush2.msra.mxu0 0.0
        %1285 = vmatprep.subr.mxu0 0.0
        %1286 = vmatpush2.msra.mxu0 0.0
        %1287 = vmatprep.subr.mxu0 0.0
        %1288 = vmatpush2.msra.mxu0 0.0
        %1289 = vmatprep.subr.mxu0 0.0
        %1290 = vmatpush2.msra.mxu0 0.0
        %1291 = vmatprep.subr.mxu0 0.0
        %1292 = vmatpush2.msra.mxu0 0.0
        %1293 = vmatprep.subr.mxu0 0.0
        %1294 = vmatpush2.msra.mxu0 0.0
        %1295 = vmatprep.mubr.f32.mxu0 0.0
        %1296 = vmatmul.mubr.f32.gmra.mxu0 %v1214
        %v1297 = vpop.f32.mrf.mxu0
        %v1298 = vadd.f32 0.0, %v1297
        %v1299 = vpop.f32.mrf.mxu0
        %1300 = vdwg.mxu0
        %1302 = vrot.lane.b32.xlu0 %v1298, 118
        %v1303 = vpop.permute.xlu0 %1302
        %v1305 = vmax.f32 %v1298, %v1303
        %1306 = vrot.lane.b32.xlu0 %v1298, 108
        %v1307 = vpop.permute.xlu0 %1306
        %v1309 = vmax.f32 %v1305, %v1307
        %1310 = vrot.lane.b32.xlu0 %v1298, 98
        %v1311 = vpop.permute.xlu0 %1310
        %v1313 = vmax.f32 %v1309, %v1311
        %1314 = vrot.lane.b32.xlu0 %v1298, 88
        %v1315 = vpop.permute.xlu0 %1314
        %v1317 = vmax.f32 %v1313, %v1315
        %1318 = vrot.lane.b32.xlu0 %v1298, 78
        %v1319 = vpop.permute.xlu0 %1318
        %v1321 = vmax.f32 %v1317, %v1319
        %1322 = vrot.lane.b32.xlu0 %v1298, 68
        %v1323 = vpop.permute.xlu0 %1322
        %v1325 = vmax.f32 %v1321, %v1323
        %1326 = vrot.lane.b32.xlu0 %v1298, 58
        %v1327 = vpop.permute.xlu0 %1326
        %v1329 = vmax.f32 %v1325, %v1327
        %v1330 = vld [vmem:[%s1 + $0x1a6] sm:$0x1]
        %v1331 = vadd.f32 %v1329, %v1330
        %vm1332 = vcmask 73728
        %1333 = vst.msk [vmem:[%s135] sm:$0x1] %vm1332, %v1331
        %s1334 = sand.u32 %s71, 1
        %s1335 = scalar_lea.sflag [#allocation4], %s1334
        %s1336 = sand.u32 %s71, 1
        %s1337 = scalar_lea.vmem [#allocation3], %s1336
        // Predicated region
        $region29: #{audio_classifier_forward.1} parent=27 // pred_check
          %p1338 = pneg %p81
        $region30: #{audio_classifier_forward.1} parent=27 // pred_check_branch
          %1340 = sbr.rel (%p1338) target = $region32
        $region31: #{audio_classifier_forward.1} parent=27 // pred_region
          %s1342 = ssub.s32 16, 16
          %1343 = vsyncadd %s1335, %s1342
          %s1344 = smul.addr %s16, 16
          %s1345 = scalar_lea.hbm %s2, %s1344
          %s1347 = sshll.u32 %s1337, 4
          %s1348 = int_to_ptr.vmem [resolvable:$true] %s1347
          %1350 = dma.vmem_to_hbm [thread:$0]  %s1348, 16, %s1345, %s1335
        $region32: #{audio_classifier_forward.1} parent=27 // pred_fallthru
          _
      $region28: #{audio_classifier_forward.1} parent=5 // pred_fallthru
        _
      %p1351 = scmp.le.s32.totalorder 2, %s11
      // Predicated region
      $region33: #{audio_classifier_forward.1} parent=5 // pred_check
        %p1352 = pneg %p1351
      $region34: #{audio_classifier_forward.1} parent=5 // pred_check_branch
        %1354 = sbr.rel (%p1352) target = $region36
      $region35: #{audio_classifier_forward.1} parent=5 // pred_region
        %s1355 = ssub.s32 %s11, 2
        // Predicated region
        $region37: #{audio_classifier_forward.1} parent=35 // pred_check
          %p1356 = pneg %p87
        $region38: #{audio_classifier_forward.1} parent=35 // pred_check_branch
          %1358 = sbr.rel (%p1356) target = $region40
        $region39: #{audio_classifier_forward.1} parent=35 // pred_region
          %s1359 = sand.u32 %s72, 1
          %s1360 = scalar_lea.sflag [#allocation4], %s1359
          %s1361 = sand.u32 %s72, 1
          %s1362 = scalar_lea.vmem [#allocation3], %s1361
          %1363 = dma.done %s1360, 16
        $region40: #{audio_classifier_forward.1} parent=35 // pred_fallthru
          _
      $region36: #{audio_classifier_forward.1} parent=5 // pred_fallthru
        _
    $region6: #{audio_classifier_forward.1} parent=1 // loop_footer
      %s15 = sadd.s32 1, %s11
    $region7: #{audio_classifier_forward.1} parent=1 // loop_footer_branch
      %10 = sbr.rel target = $region3
    $region8: #{audio_classifier_forward.1} parent=1 // loop_exit
      _
    %1364 = vsyncpa [#allocation4], 1
    %s1365 = scalar_lea.sflag [#allocation4], 1
    %1366 = vsyncpa %s1365, 1

</llo_original>
